<compile_context>
chip_gen: v6e
topology: v6e:2x2x1
jax: 0.10.0
libtpu: 0.0.40
codegen_flags: <defaults>
</compile_context>

<pallas_src>
import functools

import jax
import jax.numpy as jnp
from jax import lax
from jax.experimental import pallas as pl
from jax.experimental.pallas import tpu as pltpu

_BN_EPS = 1e-5
_LANE = 128
_SUBLANE = 8
_MAX_TILE_H = 256                 # hard cap on output rows per grid step
_VMEM_TILE_BUDGET = 10 * 2**20    # per-step working-set target (safe on v5e/v6e/v7x)
_VMEM_LIMIT_BYTES = 32 * 2**20    # raise v5e's 16 MiB scoped default; <= v7x physical


# ---------------------------------------------------------------------------
# Kernel
# ---------------------------------------------------------------------------
def _conv_bn_relu_kernel(*refs, K, stride, KWg, full_fold, TH, Wo, halo, fuse_out):
    """One (batch, row-tile) grid step: KxK stride-s conv + BN + ReLU (+ fused 1x1)."""
    x_ref = refs[0]                      # (1, TH,  s, Wq, CG)  bf16 main rows
    halo_refs = refs[1:1 + halo]         # halo x (1, 1, s, Wq, CG) extra rows
    w_ref = refs[1 + halo]               # (n_groups, depth, Cout) bf16, BN-scale folded
    shift_ref = refs[2 + halo]           # (1, Cout) f32 BN shift
    if fuse_out:
        w2_ref = refs[3 + halo]          # (Cout, Cout2) bf16, BN-scale folded
        shift2_ref = refs[4 + halo]      # (1, Cout2) f32
    o_ref = refs[-1]                     # (1, TH, Wo, Cout_out)

    CG = x_ref.shape[-1]                 # stride * Cin (W-parity folded onto lanes)
    TM = TH * Wo

    # Stitch main rows and the 1-row halo blocks into one (TH+halo, s, Wq, CG)
    # window.  Axis-0 concat is an outer-dim stack of vreg tiles (cheap).
    x_all = jnp.concatenate([x_ref[0]] + [r[0] for r in halo_refs], axis=0)

    def tap(kh, qw):
        qh, rh = kh // stride, kh % stride
        return x_all[qh:qh + TH, rh, qw:qw + Wo, :].reshape(TM, CG)

    # full_fold (layer 1): one deep im2col contraction over all taps.
    # otherwise (3x3 layers): one depth-(KWg*CG)=256 contraction per kh row.
    groups = [list(range(K))] if full_fold else [[kh] for kh in range(K)]

    acc = None
    for gi, khs in enumerate(groups):
        pieces = [tap(kh, qw) for kh in khs for qw in range(KWg)]
        lhs = pieces[0] if len(pieces) == 1 else jnp.concatenate(pieces, axis=-1)
        part = jnp.dot(lhs, w_ref[gi], preferred_element_type=jnp.float32)
        acc = part if acc is None else acc + part

    y = jnp.maximum(acc + shift_ref[...], 0.0)          # BN shift + ReLU (f32)

    if fuse_out:                                        # fused 1x1 conv_out + BN + ReLU
        y = jnp.dot(y.astype(w2_ref.dtype), w2_ref[...],
                    preferred_element_type=jnp.float32)
        y = jnp.maximum(y + shift2_ref[...], 0.0)

    o_ref[0] = y.reshape(TH, Wo, -1).astype(o_ref.dtype)


# ---------------------------------------------------------------------------
# Wrapper-side helpers
# ---------------------------------------------------------------------------
def _fold_weights(w_oihw, gamma, beta, mean, var, *, stride, cin_pad, full_fold):
    """OIHW -> grouped (n_groups, depth, Cout) bf16 weights with BN scale folded in."""
    Cout, Cin, K, _ = w_oihw.shape
    s = stride
    KWg = -(-K // s)
    scale = gamma * lax.rsqrt(var + _BN_EPS)
    shift = (beta - mean * scale).reshape(1, Cout).astype(jnp.float32)
    w = jnp.transpose(w_oihw, (2, 3, 1, 0)) * scale          # HWIO, scale folded (f32)
    if cin_pad > Cin:
        w = jnp.pad(w, ((0, 0), (0, 0), (0, cin_pad - Cin), (0, 0)))
    # Group kw taps by W-stride phase (zero weights for the kw >= K padding slot).
    wg = jnp.zeros((K, KWg * s, cin_pad, Cout), w.dtype)
    wg = wg.at[:, :K].set(w).reshape(K, KWg, s * cin_pad, Cout)
    if full_fold:
        wg = wg.reshape(1, K * KWg * s * cin_pad, Cout)
    else:
        wg = wg.reshape(K, KWg * s * cin_pad, Cout)
    return wg.astype(jnp.bfloat16), shift


def _pick_tile_h(*, Ho, Wo, Wq, s, CG, depth, Cout, Cout_out, out_bytes, halo,
                 max_tile_h):
    """Largest output-row tile whose VMEM working set fits the per-step budget."""
    def up(v, m):
        return -(-v // m) * m

    cgp = up(CG, _LANE)
    wqp = up(Wq, _SUBLANE)
    row = s * wqp * cgp * 2                       # one folded input row in VMEM (bf16)

    def est(th):
        tm = up(th * Wo, _SUBLANE)
        v_in = (2 * th + 2 * halo) * row          # double-buffered main + halo blocks
        v_win = (th + halo) * row                 # stitched window temporary
        v_lhs = tm * up(depth, _LANE) * 2         # im2col matmul operand (bf16)
        v_acc = tm * (up(Cout, _LANE) + up(Cout_out, _LANE)) * 4
        v_out = 2 * th * up(Wo, _SUBLANE) * up(Cout_out, _LANE) * out_bytes
        return v_in + v_win + v_lhs + v_acc + v_out

    th = max(1, min(Ho, max_tile_h))
    while th > 1 and est(th) > _VMEM_TILE_BUDGET:
        th -= 1
    # Prefer a tile that divides Ho (no partially-masked output blocks), unless that
    # would more than halve the tile.
    for d in range(th, 0, -1):
        if Ho % d == 0:
            return d if 2 * d >= th else th
    return th


# ---------------------------------------------------------------------------
# One fused ConvBNReLU layer (optionally with the trailing 1x1 ConvBNReLU fused in)
# ---------------------------------------------------------------------------
@functools.partial(jax.jit, static_argnames=("stride", "pad", "full_fold", "cin_pad",
                                             "out_dtype", "max_tile_h"))
def conv_bn_relu(x, w, gamma, beta, mean, var, *, stride, pad, full_fold=False,
                 cin_pad=None, out_dtype=jnp.bfloat16, max_tile_h=_MAX_TILE_H,
                 w2=None, gamma2=None, beta2=None, mean2=None, var2=None):
    """NHWC in / NHWC out.  Conv2d(bias=False) + BN(inference) + ReLU (+ fused 1x1)."""
    N, H, W, Cin0 = x.shape
    Cout, _, K, _ = w.shape
    s = stride
    cin = Cin0 if cin_pad is None else cin_pad
    assert cin >= Cin0

    KWg = -(-K // s)                   # kw taps per W-stride phase group
    halo = (K - 1) // s                # extra folded input rows needed below a tile
    assert halo >= 1, "stride-1 convs are only supported fused into a stride-2 layer"

    Ho = (H + 2 * pad - K) // s + 1
    Wo = (W + 2 * pad - K) // s + 1
    Wq = Wo + (KWg - 1)
    CG = s * cin
    Cout_out = Cout if w2 is None else w2.shape[0]
    depth = (K if full_fold else 1) * KWg * CG
    out_bytes = jnp.dtype(out_dtype).itemsize

    TH = _pick_tile_h(Ho=Ho, Wo=Wo, Wq=Wq, s=s, CG=CG, depth=depth, Cout=Cout,
                      Cout_out=Cout_out, out_bytes=out_bytes, halo=halo,
                      max_tile_h=max_tile_h)
    nH = -(-Ho // TH)
    Hq = nH * TH + halo                # folded rows covered by all main + halo blocks
    Hp, Wp = s * Hq, s * Wq
    pad_b, pad_r = Hp - H - pad, Wp - W - pad
    assert pad_b >= 0 and pad_r >= 0, "unsupported K/stride/pad combination"

    # Single bf16 pad (spatial halo + optional channel pad), then a *free* row-major
    # reinterpretation folding the W stride-parity into the lane dim.
    # TODO(synk): remove this HBM round trip (write outputs pre-padded / zero the halo in VMEM).
    xp = jnp.pad(x.astype(jnp.bfloat16),
                 ((0, 0), (pad, pad_b), (pad, pad_r), (0, cin - Cin0)))
    xr = xp.reshape(N, Hq, s, Wq, CG)

    wg, shift = _fold_weights(w, gamma, beta, mean, var, stride=s, cin_pad=cin,
                              full_fold=full_fold)
    n_groups = wg.shape[0]

    args = [xr] + [xr] * halo + [wg, shift]
    in_specs = [pl.BlockSpec((1, TH, s, Wq, CG), lambda n, h: (n, h, 0, 0, 0))]
    # Halo rows as 1-row blocks at element-granular offsets (h+1)*TH + j: overlapping
    # row windows with plain Blocked specs, no divisibility constraint on TH.
    in_specs += [
        pl.BlockSpec((1, 1, s, Wq, CG),
                     lambda n, h, j=j, th=TH: (n, (h + 1) * th + j, 0, 0, 0))
        for j in range(halo)
    ]
    in_specs += [
        pl.BlockSpec((n_groups, depth, Cout), lambda n, h: (0, 0, 0)),
        pl.BlockSpec((1, Cout), lambda n, h: (0, 0)),
    ]

    fuse_out = w2 is not None
    if fuse_out:
        scale2 = gamma2 * lax.rsqrt(var2 + _BN_EPS)
        shift2 = (beta2 - mean2 * scale2).reshape(1, Cout_out).astype(jnp.float32)
        w2m = (w2[:, :, 0, 0].T * scale2).astype(jnp.bfloat16)     # (Cout, Cout_out)
        args += [w2m, shift2]
        in_specs += [
            pl.BlockSpec((Cout, Cout_out), lambda n, h: (0, 0)),
            pl.BlockSpec((1, Cout_out), lambda n, h: (0, 0)),
        ]

    out_specs = pl.BlockSpec((1, TH, Wo, Cout_out), lambda n, h: (n, h, 0, 0))

    flops = 2 * N * Ho * Wo * n_groups * depth * Cout
    if fuse_out:
        flops += 2 * N * Ho * Wo * Cout * Cout_out
    bytes_accessed = int(xr.size * xr.dtype.itemsize + wg.size * wg.dtype.itemsize
                         + N * Ho * Wo * Cout_out * out_bytes)

    kernel = functools.partial(
        _conv_bn_relu_kernel, K=K, stride=s, KWg=KWg, full_fold=full_fold,
        TH=TH, Wo=Wo, halo=halo, fuse_out=fuse_out)

    return pl.pallas_call(
        kernel,
        out_shape=jax.ShapeDtypeStruct((N, Ho, Wo, Cout_out), out_dtype),
        grid_spec=pltpu.PrefetchScalarGridSpec(
            num_scalar_prefetch=0,
            grid=(N, nH),
            in_specs=in_specs,
            out_specs=out_specs),
        compiler_params=pltpu.CompilerParams(
            dimension_semantics=("parallel", "parallel"),
            vmem_limit_bytes=_VMEM_LIMIT_BYTES),
        cost_estimate=pl.CostEstimate(flops=flops, transcendentals=0,
                                      bytes_accessed=bytes_accessed),
    )(*args)


# ---------------------------------------------------------------------------
# TexturePath forward
# ---------------------------------------------------------------------------
def texture_path_forward(x_nchw, params, max_tile_h=_MAX_TILE_H):
    """TexturePath forward: (N, 3, H, W) -> (N, 128, H/8, W/8)."""
    p1, p2, p3, p4 = params
    x = jnp.transpose(x_nchw, (0, 2, 3, 1))                 # single boundary transpose
    # conv1: 7x7/2, Cin padded 3->4; full in-kernel im2col (depth 224, one MXU pass set).
    x = conv_bn_relu(x, p1["w"], p1["gamma"], p1["beta"], p1["mean"], p1["var"],
                     stride=p1["stride"], pad=p1["pad"], full_fold=True, cin_pad=4,
                     out_dtype=jnp.bfloat16, max_tile_h=max_tile_h)
    # conv2: 3x3/2, depth-256 packed contractions, bf16 activations.
    x = conv_bn_relu(x, p2["w"], p2["gamma"], p2["beta"], p2["mean"], p2["var"],
                     stride=p2["stride"], pad=p2["pad"],
                     out_dtype=jnp.bfloat16, max_tile_h=max_tile_h)
    # conv3 + fused 1x1 conv_out: writes the 128-lane-dense final feature map directly.
    x = conv_bn_relu(x, p3["w"], p3["gamma"], p3["beta"], p3["mean"], p3["var"],
                     stride=p3["stride"], pad=p3["pad"],
                     out_dtype=jnp.float32, max_tile_h=max_tile_h,
                     w2=p4["w"], gamma2=p4["gamma"], beta2=p4["beta"],
                     mean2=p4["mean"], var2=p4["var"])
    return jnp.transpose(x, (0, 3, 1, 2))                   # back to NCHW


def _texture_path_reference(x_nchw, params):
    """Pure-JAX reference (matches PyTorch eval-mode semantics, f32 HIGHEST)."""
    x = x_nchw
    for lp in params:
        conv = lax.conv_general_dilated(
            x, lp["w"],
            window_strides=(lp["stride"], lp["stride"]),
            padding=((lp["pad"], lp["pad"]), (lp["pad"], lp["pad"])),
            dimension_numbers=("NCHW", "OIHW", "NCHW"),
            precision=lax.Precision.HIGHEST)
        scale = lp["gamma"] * lax.rsqrt(lp["var"] + _BN_EPS)
        shift = lp["beta"] - lp["mean"] * scale
        x = jnp.maximum(conv * scale[None, :, None, None]
                        + shift[None, :, None, None], 0.0)
    return x


if __name__ == "__main__":
    key = jax.random.PRNGKey(0)

    # (cin, cout, K, stride, pad) — exactly the TexturePath layer stack.
    cfgs = [(3, 64, 7, 2, 3), (64, 64, 3, 2, 1), (64, 64, 3, 2, 1), (64, 128, 1, 1, 0)]
    params = []
    for i, (cin, cout, K, s, p) in enumerate(cfgs):
        kw_, kg, kb, km, kv = jax.random.split(jax.random.fold_in(key, i + 1), 5)
        std = 1.0 / (cin * K * K) ** 0.5           # kaiming_normal_(a=1): gain = 1
        params.append(dict(
            w=jax.random.normal(kw_, (cout, cin, K, K), jnp.float32) * std,
            gamma=jax.random.uniform(kg, (cout,), jnp.float32, 0.5, 1.5),
            beta=0.1 * jax.random.normal(kb, (cout,), jnp.float32),
            mean=0.1 * jax.random.normal(km, (cout,), jnp.float32),
            var=jax.random.uniform(kv, (cout,), jnp.float32, 0.5, 1.5),
            K=K, stride=s, pad=p))

    # Test 1: toy TexturePath input (single row tile per layer).
    x = jax.random.normal(jax.random.fold_in(key, 0), (2, 3, 16, 16), jnp.float32)
    out = jax.block_until_ready(texture_path_forward(x, params))
    ref = jax.block_until_ready(_texture_path_reference(x, params))
    assert out.shape == (2, 128, 2, 2), out.shape
    # bf16 weights/activations with f32 accumulation vs. f32 HIGHEST reference.
    assert jnp.allclose(out, ref, atol=1e-1, rtol=5e-2), \
        float(jnp.max(jnp.abs(out - ref)))

    # Test 2: force tiny row tiles so the multi-tile / halo-BlockSpec path is exercised.
    x2 = jax.random.normal(jax.random.fold_in(key, 7), (1, 3, 32, 32), jnp.float32)
    out2 = jax.block_until_ready(texture_path_forward(x2, params, max_tile_h=3))
    ref2 = jax.block_until_ready(_texture_path_reference(x2, params))
    assert out2.shape == (1, 128, 4, 4), out2.shape
    assert jnp.allclose(out2, ref2, atol=1e-1, rtol=5e-2), \
        float(jnp.max(jnp.abs(out2 - ref2)))

    print("KERNEL_OK")
</pallas_src>

<mosaic_0001>
module attributes {stable_mosaic.version = 11 : i64} {
  func.func @_conv_bn_relu_kernel(%arg0: i32, %arg1: i32, %arg2: memref<1x8x2x11x8xbf16, #tpu.memory_space<vmem>>, %arg3: memref<1x1x2x11x8xbf16, #tpu.memory_space<vmem>>, %arg4: memref<1x1x2x11x8xbf16, #tpu.memory_space<vmem>>, %arg5: memref<1x1x2x11x8xbf16, #tpu.memory_space<vmem>>, %arg6: memref<1x224x64xbf16, #tpu.memory_space<vmem>>, %arg7: memref<1x64xf32, #tpu.memory_space<vmem>>, %arg8: memref<1x8x8x64xbf16, #tpu.memory_space<vmem>>) attributes {dimension_semantics = [#tpu.dimension_semantics<parallel>, #tpu.dimension_semantics<parallel>], iteration_bounds = array<i64: 2, 1>, scalar_prefetch = 0 : i64, scratch_operands = 0 : i64, tpu.core_type = #tpu.core_type<tc>, window_params = [{transform_indices = @transform_0, window_bounds = array<i64: 1, 8, 2, 11, 8>}, {transform_indices = @transform_1, window_bounds = array<i64: 1, 1, 2, 11, 8>}, {transform_indices = @transform_2, window_bounds = array<i64: 1, 1, 2, 11, 8>}, {transform_indices = @transform_3, window_bounds = array<i64: 1, 1, 2, 11, 8>}, {pipeline_mode = #tpu.pipeline_mode<synchronous>, transform_indices = @transform_4, window_bounds = array<i64: 1, 224, 64>}, {pipeline_mode = #tpu.pipeline_mode<synchronous>, transform_indices = @transform_5, window_bounds = array<i64: 1, 64>}, {transform_indices = @transform_6, window_bounds = array<i64: 1, 8, 8, 64>}]} {
    %c0 = arith.constant 0 : index
    %c0_0 = arith.constant 0 : index
    %c0_1 = arith.constant 0 : index
    %c0_2 = arith.constant 0 : index
    %c0_3 = arith.constant 0 : index
    %0 = vector.load %arg2[%c0, %c0_0, %c0_1, %c0_2, %c0_3] : memref<1x8x2x11x8xbf16, #tpu.memory_space<vmem>>, vector<1x8x2x11x8xbf16>
    %1 = vector.shape_cast %0 : vector<1x8x2x11x8xbf16> to vector<8x2x11x8xbf16>
    %c0_4 = arith.constant 0 : index
    %c0_5 = arith.constant 0 : index
    %c0_6 = arith.constant 0 : index
    %c0_7 = arith.constant 0 : index
    %c0_8 = arith.constant 0 : index
    %2 = vector.load %arg3[%c0_4, %c0_5, %c0_6, %c0_7, %c0_8] : memref<1x1x2x11x8xbf16, #tpu.memory_space<vmem>>, vector<1x1x2x11x8xbf16>
    %3 = vector.shape_cast %2 : vector<1x1x2x11x8xbf16> to vector<1x2x11x8xbf16>
    %c0_9 = arith.constant 0 : index
    %c0_10 = arith.constant 0 : index
    %c0_11 = arith.constant 0 : index
    %c0_12 = arith.constant 0 : index
    %c0_13 = arith.constant 0 : index
    %4 = vector.load %arg4[%c0_9, %c0_10, %c0_11, %c0_12, %c0_13] : memref<1x1x2x11x8xbf16, #tpu.memory_space<vmem>>, vector<1x1x2x11x8xbf16>
    %5 = vector.shape_cast %4 : vector<1x1x2x11x8xbf16> to vector<1x2x11x8xbf16>
    %c0_14 = arith.constant 0 : index
    %c0_15 = arith.constant 0 : index
    %c0_16 = arith.constant 0 : index
    %c0_17 = arith.constant 0 : index
    %c0_18 = arith.constant 0 : index
    %6 = vector.load %arg5[%c0_14, %c0_15, %c0_16, %c0_17, %c0_18] : memref<1x1x2x11x8xbf16, #tpu.memory_space<vmem>>, vector<1x1x2x11x8xbf16>
    %7 = vector.shape_cast %6 : vector<1x1x2x11x8xbf16> to vector<1x2x11x8xbf16>
    %8 = tpu.concatenate %1, %3, %5, %7 in 0 : vector<8x2x11x8xbf16>, vector<1x2x11x8xbf16>, vector<1x2x11x8xbf16>, vector<1x2x11x8xbf16> -> vector<11x2x11x8xbf16>
    %9 = vector.extract_strided_slice %8 {offsets = [0, 0, 0, 0], sizes = [8, 1, 8, 8], strides = [1, 1, 1, 1]} : vector<11x2x11x8xbf16> to vector<8x1x8x8xbf16>
    %10 = vector.shape_cast %9 : vector<8x1x8x8xbf16> to vector<8x8x8xbf16>
    %11 = vector.shape_cast %10 : vector<8x8x8xbf16> to vector<64x8xbf16>
    %12 = vector.extract_strided_slice %8 {offsets = [0, 0, 1, 0], sizes = [8, 1, 8, 8], strides = [1, 1, 1, 1]} : vector<11x2x11x8xbf16> to vector<8x1x8x8xbf16>
    %13 = vector.shape_cast %12 : vector<8x1x8x8xbf16> to vector<8x8x8xbf16>
    %14 = vector.shape_cast %13 : vector<8x8x8xbf16> to vector<64x8xbf16>
    %15 = vector.extract_strided_slice %8 {offsets = [0, 0, 2, 0], sizes = [8, 1, 8, 8], strides = [1, 1, 1, 1]} : vector<11x2x11x8xbf16> to vector<8x1x8x8xbf16>
    %16 = vector.shape_cast %15 : vector<8x1x8x8xbf16> to vector<8x8x8xbf16>
    %17 = vector.shape_cast %16 : vector<8x8x8xbf16> to vector<64x8xbf16>
    %18 = vector.extract_strided_slice %8 {offsets = [0, 0, 3, 0], sizes = [8, 1, 8, 8], strides = [1, 1, 1, 1]} : vector<11x2x11x8xbf16> to vector<8x1x8x8xbf16>
    %19 = vector.shape_cast %18 : vector<8x1x8x8xbf16> to vector<8x8x8xbf16>
    %20 = vector.shape_cast %19 : vector<8x8x8xbf16> to vector<64x8xbf16>
    %21 = vector.extract_strided_slice %8 {offsets = [0, 1, 0, 0], sizes = [8, 1, 8, 8], strides = [1, 1, 1, 1]} : vector<11x2x11x8xbf16> to vector<8x1x8x8xbf16>
    %22 = vector.shape_cast %21 : vector<8x1x8x8xbf16> to vector<8x8x8xbf16>
    %23 = vector.shape_cast %22 : vector<8x8x8xbf16> to vector<64x8xbf16>
    %24 = vector.extract_strided_slice %8 {offsets = [0, 1, 1, 0], sizes = [8, 1, 8, 8], strides = [1, 1, 1, 1]} : vector<11x2x11x8xbf16> to vector<8x1x8x8xbf16>
    %25 = vector.shape_cast %24 : vector<8x1x8x8xbf16> to vector<8x8x8xbf16>
    %26 = vector.shape_cast %25 : vector<8x8x8xbf16> to vector<64x8xbf16>
    %27 = vector.extract_strided_slice %8 {offsets = [0, 1, 2, 0], sizes = [8, 1, 8, 8], strides = [1, 1, 1, 1]} : vector<11x2x11x8xbf16> to vector<8x1x8x8xbf16>
    %28 = vector.shape_cast %27 : vector<8x1x8x8xbf16> to vector<8x8x8xbf16>
    %29 = vector.shape_cast %28 : vector<8x8x8xbf16> to vector<64x8xbf16>
    %30 = vector.extract_strided_slice %8 {offsets = [0, 1, 3, 0], sizes = [8, 1, 8, 8], strides = [1, 1, 1, 1]} : vector<11x2x11x8xbf16> to vector<8x1x8x8xbf16>
    %31 = vector.shape_cast %30 : vector<8x1x8x8xbf16> to vector<8x8x8xbf16>
    %32 = vector.shape_cast %31 : vector<8x8x8xbf16> to vector<64x8xbf16>
    %33 = vector.extract_strided_slice %8 {offsets = [1, 0, 0, 0], sizes = [8, 1, 8, 8], strides = [1, 1, 1, 1]} : vector<11x2x11x8xbf16> to vector<8x1x8x8xbf16>
    %34 = vector.shape_cast %33 : vector<8x1x8x8xbf16> to vector<8x8x8xbf16>
    %35 = vector.shape_cast %34 : vector<8x8x8xbf16> to vector<64x8xbf16>
    %36 = vector.extract_strided_slice %8 {offsets = [1, 0, 1, 0], sizes = [8, 1, 8, 8], strides = [1, 1, 1, 1]} : vector<11x2x11x8xbf16> to vector<8x1x8x8xbf16>
    %37 = vector.shape_cast %36 : vector<8x1x8x8xbf16> to vector<8x8x8xbf16>
    %38 = vector.shape_cast %37 : vector<8x8x8xbf16> to vector<64x8xbf16>
    %39 = vector.extract_strided_slice %8 {offsets = [1, 0, 2, 0], sizes = [8, 1, 8, 8], strides = [1, 1, 1, 1]} : vector<11x2x11x8xbf16> to vector<8x1x8x8xbf16>
    %40 = vector.shape_cast %39 : vector<8x1x8x8xbf16> to vector<8x8x8xbf16>
    %41 = vector.shape_cast %40 : vector<8x8x8xbf16> to vector<64x8xbf16>
    %42 = vector.extract_strided_slice %8 {offsets = [1, 0, 3, 0], sizes = [8, 1, 8, 8], strides = [1, 1, 1, 1]} : vector<11x2x11x8xbf16> to vector<8x1x8x8xbf16>
    %43 = vector.shape_cast %42 : vector<8x1x8x8xbf16> to vector<8x8x8xbf16>
    %44 = vector.shape_cast %43 : vector<8x8x8xbf16> to vector<64x8xbf16>
    %45 = vector.extract_strided_slice %8 {offsets = [1, 1, 0, 0], sizes = [8, 1, 8, 8], strides = [1, 1, 1, 1]} : vector<11x2x11x8xbf16> to vector<8x1x8x8xbf16>
    %46 = vector.shape_cast %45 : vector<8x1x8x8xbf16> to vector<8x8x8xbf16>
    %47 = vector.shape_cast %46 : vector<8x8x8xbf16> to vector<64x8xbf16>
    %48 = vector.extract_strided_slice %8 {offsets = [1, 1, 1, 0], sizes = [8, 1, 8, 8], strides = [1, 1, 1, 1]} : vector<11x2x11x8xbf16> to vector<8x1x8x8xbf16>
    %49 = vector.shape_cast %48 : vector<8x1x8x8xbf16> to vector<8x8x8xbf16>
    %50 = vector.shape_cast %49 : vector<8x8x8xbf16> to vector<64x8xbf16>
    %51 = vector.extract_strided_slice %8 {offsets = [1, 1, 2, 0], sizes = [8, 1, 8, 8], strides = [1, 1, 1, 1]} : vector<11x2x11x8xbf16> to vector<8x1x8x8xbf16>
    %52 = vector.shape_cast %51 : vector<8x1x8x8xbf16> to vector<8x8x8xbf16>
    %53 = vector.shape_cast %52 : vector<8x8x8xbf16> to vector<64x8xbf16>
    %54 = vector.extract_strided_slice %8 {offsets = [1, 1, 3, 0], sizes = [8, 1, 8, 8], strides = [1, 1, 1, 1]} : vector<11x2x11x8xbf16> to vector<8x1x8x8xbf16>
    %55 = vector.shape_cast %54 : vector<8x1x8x8xbf16> to vector<8x8x8xbf16>
    %56 = vector.shape_cast %55 : vector<8x8x8xbf16> to vector<64x8xbf16>
    %57 = vector.extract_strided_slice %8 {offsets = [2, 0, 0, 0], sizes = [8, 1, 8, 8], strides = [1, 1, 1, 1]} : vector<11x2x11x8xbf16> to vector<8x1x8x8xbf16>
    %58 = vector.shape_cast %57 : vector<8x1x8x8xbf16> to vector<8x8x8xbf16>
    %59 = vector.shape_cast %58 : vector<8x8x8xbf16> to vector<64x8xbf16>
    %60 = vector.extract_strided_slice %8 {offsets = [2, 0, 1, 0], sizes = [8, 1, 8, 8], strides = [1, 1, 1, 1]} : vector<11x2x11x8xbf16> to vector<8x1x8x8xbf16>
    %61 = vector.shape_cast %60 : vector<8x1x8x8xbf16> to vector<8x8x8xbf16>
    %62 = vector.shape_cast %61 : vector<8x8x8xbf16> to vector<64x8xbf16>
    %63 = vector.extract_strided_slice %8 {offsets = [2, 0, 2, 0], sizes = [8, 1, 8, 8], strides = [1, 1, 1, 1]} : vector<11x2x11x8xbf16> to vector<8x1x8x8xbf16>
    %64 = vector.shape_cast %63 : vector<8x1x8x8xbf16> to vector<8x8x8xbf16>
    %65 = vector.shape_cast %64 : vector<8x8x8xbf16> to vector<64x8xbf16>
    %66 = vector.extract_strided_slice %8 {offsets = [2, 0, 3, 0], sizes = [8, 1, 8, 8], strides = [1, 1, 1, 1]} : vector<11x2x11x8xbf16> to vector<8x1x8x8xbf16>
    %67 = vector.shape_cast %66 : vector<8x1x8x8xbf16> to vector<8x8x8xbf16>
    %68 = vector.shape_cast %67 : vector<8x8x8xbf16> to vector<64x8xbf16>
    %69 = vector.extract_strided_slice %8 {offsets = [2, 1, 0, 0], sizes = [8, 1, 8, 8], strides = [1, 1, 1, 1]} : vector<11x2x11x8xbf16> to vector<8x1x8x8xbf16>
    %70 = vector.shape_cast %69 : vector<8x1x8x8xbf16> to vector<8x8x8xbf16>
    %71 = vector.shape_cast %70 : vector<8x8x8xbf16> to vector<64x8xbf16>
    %72 = vector.extract_strided_slice %8 {offsets = [2, 1, 1, 0], sizes = [8, 1, 8, 8], strides = [1, 1, 1, 1]} : vector<11x2x11x8xbf16> to vector<8x1x8x8xbf16>
    %73 = vector.shape_cast %72 : vector<8x1x8x8xbf16> to vector<8x8x8xbf16>
    %74 = vector.shape_cast %73 : vector<8x8x8xbf16> to vector<64x8xbf16>
    %75 = vector.extract_strided_slice %8 {offsets = [2, 1, 2, 0], sizes = [8, 1, 8, 8], strides = [1, 1, 1, 1]} : vector<11x2x11x8xbf16> to vector<8x1x8x8xbf16>
    %76 = vector.shape_cast %75 : vector<8x1x8x8xbf16> to vector<8x8x8xbf16>
    %77 = vector.shape_cast %76 : vector<8x8x8xbf16> to vector<64x8xbf16>
    %78 = vector.extract_strided_slice %8 {offsets = [2, 1, 3, 0], sizes = [8, 1, 8, 8], strides = [1, 1, 1, 1]} : vector<11x2x11x8xbf16> to vector<8x1x8x8xbf16>
    %79 = vector.shape_cast %78 : vector<8x1x8x8xbf16> to vector<8x8x8xbf16>
    %80 = vector.shape_cast %79 : vector<8x8x8xbf16> to vector<64x8xbf16>
    %81 = vector.extract_strided_slice %8 {offsets = [3, 0, 0, 0], sizes = [8, 1, 8, 8], strides = [1, 1, 1, 1]} : vector<11x2x11x8xbf16> to vector<8x1x8x8xbf16>
    %82 = vector.shape_cast %81 : vector<8x1x8x8xbf16> to vector<8x8x8xbf16>
    %83 = vector.shape_cast %82 : vector<8x8x8xbf16> to vector<64x8xbf16>
    %84 = vector.extract_strided_slice %8 {offsets = [3, 0, 1, 0], sizes = [8, 1, 8, 8], strides = [1, 1, 1, 1]} : vector<11x2x11x8xbf16> to vector<8x1x8x8xbf16>
    %85 = vector.shape_cast %84 : vector<8x1x8x8xbf16> to vector<8x8x8xbf16>
    %86 = vector.shape_cast %85 : vector<8x8x8xbf16> to vector<64x8xbf16>
    %87 = vector.extract_strided_slice %8 {offsets = [3, 0, 2, 0], sizes = [8, 1, 8, 8], strides = [1, 1, 1, 1]} : vector<11x2x11x8xbf16> to vector<8x1x8x8xbf16>
    %88 = vector.shape_cast %87 : vector<8x1x8x8xbf16> to vector<8x8x8xbf16>
    %89 = vector.shape_cast %88 : vector<8x8x8xbf16> to vector<64x8xbf16>
    %90 = vector.extract_strided_slice %8 {offsets = [3, 0, 3, 0], sizes = [8, 1, 8, 8], strides = [1, 1, 1, 1]} : vector<11x2x11x8xbf16> to vector<8x1x8x8xbf16>
    %91 = vector.shape_cast %90 : vector<8x1x8x8xbf16> to vector<8x8x8xbf16>
    %92 = vector.shape_cast %91 : vector<8x8x8xbf16> to vector<64x8xbf16>
    %93 = tpu.concatenate %11, %14, %17, %20, %23, %26, %29, %32, %35, %38, %41, %44, %47, %50, %53, %56 in 1 : vector<64x8xbf16>, vector<64x8xbf16>, vector<64x8xbf16>, vector<64x8xbf16>, vector<64x8xbf16>, vector<64x8xbf16>, vector<64x8xbf16>, vector<64x8xbf16>, vector<64x8xbf16>, vector<64x8xbf16>, vector<64x8xbf16>, vector<64x8xbf16>, vector<64x8xbf16>, vector<64x8xbf16>, vector<64x8xbf16>, vector<64x8xbf16> -> vector<64x128xbf16>
    %94 = tpu.concatenate %59, %62, %65, %68, %71, %74, %77, %80, %83, %86, %89, %92 in 1 : vector<64x8xbf16>, vector<64x8xbf16>, vector<64x8xbf16>, vector<64x8xbf16>, vector<64x8xbf16>, vector<64x8xbf16>, vector<64x8xbf16>, vector<64x8xbf16>, vector<64x8xbf16>, vector<64x8xbf16>, vector<64x8xbf16>, vector<64x8xbf16> -> vector<64x96xbf16>
    %95 = tpu.concatenate %93, %94 in 1 : vector<64x128xbf16>, vector<64x96xbf16> -> vector<64x224xbf16>
    %c0_19 = arith.constant 0 : index
    %c0_20 = arith.constant 0 : index
    %c0_21 = arith.constant 0 : index
    %96 = vector.load %arg6[%c0_19, %c0_20, %c0_21] : memref<1x224x64xbf16, #tpu.memory_space<vmem>>, vector<1x224x64xbf16>
    %97 = vector.shape_cast %96 : vector<1x224x64xbf16> to vector<224x64xbf16>
    %cst = arith.constant dense<0.000000e+00> : vector<64x64xf32>
    %98 = tpu.matmul %95, %97, %cst {dimension_numbers = #tpu.dot_dimension_numbers<[1], [0], [0], [1], [0, 0, 1, 1], [], []>} : vector<64x224xbf16>, vector<224x64xbf16>, vector<64x64xf32> -> vector<64x64xf32>
    %c0_22 = arith.constant 0 : index
    %c0_23 = arith.constant 0 : index
    %99 = vector.load %arg7[%c0_22, %c0_23] : memref<1x64xf32, #tpu.memory_space<vmem>>, vector<1x64xf32>
    %100 = vector.broadcast %99 : vector<1x64xf32> to vector<64x64xf32>
    %101 = arith.addf %98, %100 : vector<64x64xf32>
    %cst_24 = arith.constant 0.000000e+00 : f32
    %102 = vector.broadcast %cst_24 : f32 to vector<64x64xf32>
    %103 = arith.maximumf %101, %102 : vector<64x64xf32>
    %104 = vector.shape_cast %103 : vector<64x64xf32> to vector<8x8x64xf32>
    %105 = arith.truncf %104 : vector<8x8x64xf32> to vector<8x8x64xbf16>
    %c0_25 = arith.constant 0 : index
    %c0_26 = arith.constant 0 : index
    %c0_27 = arith.constant 0 : index
    %c0_28 = arith.constant 0 : index
    %106 = vector.load %arg8[%c0_25, %c0_26, %c0_27, %c0_28] : memref<1x8x8x64xbf16, #tpu.memory_space<vmem>>, vector<1x8x8x64xbf16>
    %107 = vector.shape_cast %106 : vector<1x8x8x64xbf16> to vector<8x8x64xbf16>
    %108 = vector.shape_cast %105 : vector<8x8x64xbf16> to vector<1x8x8x64xbf16>
    tpu.vector_store %arg8[%c0_25, %c0_26, %c0_27, %c0_28], %108 {strides = array<i32>} : memref<1x8x8x64xbf16, #tpu.memory_space<vmem>>, vector<1x8x8x64xbf16>,
    return
  }
  func.func @transform_0(%arg0: i32, %arg1: i32) -> (i32, i32, i32, i32, i32) {
    %c0_i32 = arith.constant 0 : i32
    %c0_i32_0 = arith.constant 0 : i32
    %c0_i32_1 = arith.constant 0 : i32
    %c0_i32_2 = arith.constant 0 : i32
    return %arg0, %arg1, %c0_i32, %c0_i32_0, %c0_i32_1 : i32, i32, i32, i32, i32
  }
  func.func @transform_1(%arg0: i32, %arg1: i32) -> (i32, i32, i32, i32, i32) {
    %c1_i32 = arith.constant 1 : i32
    %0 = arith.addi %arg1, %c1_i32 : i32
    %c8_i32 = arith.constant 8 : i32
    %1 = arith.muli %0, %c8_i32 : i32
    %c0_i32 = arith.constant 0 : i32
    %2 = arith.addi %1, %c0_i32 : i32
    %c0_i32_0 = arith.constant 0 : i32
    %c0_i32_1 = arith.constant 0 : i32
    %c0_i32_2 = arith.constant 0 : i32
    %c0_i32_3 = arith.constant 0 : i32
    return %arg0, %2, %c0_i32_0, %c0_i32_1, %c0_i32_2 : i32, i32, i32, i32, i32
  }
  func.func @transform_2(%arg0: i32, %arg1: i32) -> (i32, i32, i32, i32, i32) {
    %c1_i32 = arith.constant 1 : i32
    %0 = arith.addi %arg1, %c1_i32 : i32
    %c8_i32 = arith.constant 8 : i32
    %1 = arith.muli %0, %c8_i32 : i32
    %c1_i32_0 = arith.constant 1 : i32
    %2 = arith.addi %1, %c1_i32_0 : i32
    %c0_i32 = arith.constant 0 : i32
    %c0_i32_1 = arith.constant 0 : i32
    %c0_i32_2 = arith.constant 0 : i32
    %c0_i32_3 = arith.constant 0 : i32
    return %arg0, %2, %c0_i32, %c0_i32_1, %c0_i32_2 : i32, i32, i32, i32, i32
  }
  func.func @transform_3(%arg0: i32, %arg1: i32) -> (i32, i32, i32, i32, i32) {
    %c1_i32 = arith.constant 1 : i32
    %0 = arith.addi %arg1, %c1_i32 : i32
    %c8_i32 = arith.constant 8 : i32
    %1 = arith.muli %0, %c8_i32 : i32
    %c2_i32 = arith.constant 2 : i32
    %2 = arith.addi %1, %c2_i32 : i32
    %c0_i32 = arith.constant 0 : i32
    %c0_i32_0 = arith.constant 0 : i32
    %c0_i32_1 = arith.constant 0 : i32
    %c0_i32_2 = arith.constant 0 : i32
    return %arg0, %2, %c0_i32, %c0_i32_0, %c0_i32_1 : i32, i32, i32, i32, i32
  }
  func.func @transform_4(%arg0: i32, %arg1: i32) -> (i32, i32, i32) {
    %c0_i32 = arith.constant 0 : i32
    %c0_i32_0 = arith.constant 0 : i32
    %c0_i32_1 = arith.constant 0 : i32
    %c0_i32_2 = arith.constant 0 : i32
    return %c0_i32, %c0_i32_0, %c0_i32_1 : i32, i32, i32
  }
  func.func @transform_5(%arg0: i32, %arg1: i32) -> (i32, i32) {
    %c0_i32 = arith.constant 0 : i32
    %c0_i32_0 = arith.constant 0 : i32
    %c0_i32_1 = arith.constant 0 : i32
    return %c0_i32, %c0_i32_0 : i32, i32
  }
  func.func @transform_6(%arg0: i32, %arg1: i32) -> (i32, i32, i32, i32) {
    %c0_i32 = arith.constant 0 : i32
    %c0_i32_0 = arith.constant 0 : i32
    %c0_i32_1 = arith.constant 0 : i32
    return %arg0, %arg1, %c0_i32, %c0_i32_0 : i32, i32, i32, i32
  }
}

</mosaic_0001>

<llo_original>
// kernel: conv_bn_relu.1
$region0: #{conv_bn_relu.1}
  #allocation0 [shape = 'u32[]', space=smem, size = 0x4, offset = 0x4, fixed_abs, tag = 'smem constant byte address 0x4 - core index']
  #allocation1 [shape = 'u32[144,128]{1,0:T(1,128)}', space=vmem, size = 0x12000, scoped, tag = 'internal scratch']
  %s0 = inlined_call_operand.vmem [shape: bf16[2,11,2,11,8], index: 0, kind: input, shape index: {}, may-alias: {0,1,2,3}]
  %s1 = inlined_call_operand.vmem [shape: bf16[2,11,2,11,8], index: 1, kind: input, shape index: {}, may-alias: {0,1,2,3}]
  %s2 = inlined_call_operand.vmem [shape: bf16[2,11,2,11,8], index: 2, kind: input, shape index: {}, may-alias: {0,1,2,3}]
  %s3 = inlined_call_operand.vmem [shape: bf16[2,11,2,11,8], index: 3, kind: input, shape index: {}, may-alias: {0,1,2,3}]
  %s4 = inlined_call_operand.vmem [shape: bf16[1,224,64], index: 4, kind: input, shape index: {}]
  %s5 = inlined_call_operand.vmem [shape: f32[1,64], index: 5, kind: input, shape index: {}]
  %s6 = inlined_call_operand.hbm [shape: bf16[2,8,8,64], index: 6, kind: output, shape index: {}]
  %s7 = sld [smem:[#allocation0]]
  $region57: #{conv_bn_relu.1} parent=0
    _
  %s9 = ssub.s32 1, %s7
  %s10 = scalar_select 0, %s9, %s7
  $region1: #{conv_bn_relu.1} parent=0
    #allocation2 [shape = 'u8[32768]{0}', space=vmem, size = 0x8000, scoped, tag = 'output window, operand 0']
    #allocation3 [shape = 's32[2]{0}', space=sflag, size = 0x8, scoped, tag = 'scoped memory for conv_bn_relu.1']
    %11 = vsyncpa [#allocation3], 0
    %s12 = scalar_lea.sflag [#allocation3], 1
    %13 = vsyncpa %s12, 0
    loop: start=0, step=1, limit=4
    $region2: #{conv_bn_relu.1} parent=1 // loop_pre_header
      _
    $region3: #{conv_bn_relu.1} parent=1 // loop_header
      %s15 = sphi 0, %s19
      %p16 = scmp.ge.s32.totalorder %s15, 4
      %s22 = sphi 0, %s34
      %s23 = sphi 0, %s30
      %s24 = sphi 0, %s22
      %s25 = sphi 0, %s23
      %s26 = sphi 0, %s24
      %s27 = sphi 0, %s25
      %s39 = sphi 0, %s41
      %s42 = sphi 0, %s39
      %s43 = sphi 0, %s42
      %s59 = sphi 0, %s43
      %s71 = sphi 0, %s73
      %s74 = sphi 0, %s71
      %s75 = sphi 0, %s74
      %s91 = sphi 0, %s75
      %s105 = sphi 0, %s107
      %s108 = sphi 0, %s105
      %s109 = sphi 0, %s108
      %s125 = sphi 0, %s109
      %s139 = sphi 0, %s141
      %s142 = sphi 0, %s139
      %s143 = sphi 0, %s142
      %s159 = sphi 0, %s143
      %s163 = sphi 0, %s163
      %s165 = sphi 0, %s163
      %s166 = sphi 0, %s165
      %s180 = sphi 0, %s166
      %s184 = sphi 0, %s184
      %s186 = sphi 0, %s184
      %s187 = sphi 0, %s186
      %s201 = sphi 0, %s187
      %s209 = sphi 0, %s211
      %s212 = sphi 0, %s209
      %s213 = sphi 0, %s212
      %s229 = sphi 0, %s213
    $region4: #{conv_bn_relu.1} parent=1 // loop_header_branch
      %18 = sbr.rel (%p16) target = $region8
    $region5: #{conv_bn_relu.1} parent=1 // loop_body
      %s20 = ssub.s32 %s15, 1
      %s21 = ssub.s32 %s15, 2
      %s28 = sadd.s32 1, %s23
      %p29 = scmp.ge.s32.totalorder %s28, 1
      %s30 = scalar_select %p29, 0, %s28
      %s31 = sadd.s32 1, %s22
      %s32 = scalar_select %p29, %s31, %s22
      %p33 = scmp.ge.s32.totalorder %s32, 2
      %s34 = scalar_select %p33, 0, %s32
      %s35 = ssub.s32 %s22, %s34
      %s36 = ssub.s32 %s23, %s30
      %s37 = sor.u32 %s35, %s36
      %p38 = scmp.eq.s32.totalorder %s37, 0
      %s40 = sadd.s32 %s39, 1
      %s41 = scalar_select %p38, %s39, %s40
      %p44 = pneg %p38
      %p45 = scmp.eq.s32.totalorder %s15, 1
      %p46 = por %p44, %p45
      %p47 = scmp.ne.s32.totalorder %s39, %s42
      %p48 = scmp.eq.s32.totalorder %s15, 0
      %p49 = por %p47, %p48
      %p50 = scmp.ne.s32.totalorder %s39, %s42
      %p51 = scmp.eq.s32.totalorder %s20, 1
      %p52 = por %p50, %p51
      %p53 = scmp.ne.s32.totalorder %s42, %s43
      %p54 = scmp.eq.s32.totalorder %s20, 0
      %p55 = por %p53, %p54
      %p56 = scmp.ne.s32.totalorder %s42, %s43
      %p57 = scmp.eq.s32.totalorder %s21, 1
      %p58 = por %p56, %p57
      %p60 = scmp.ne.s32.totalorder %s43, %s59
      %p61 = scmp.eq.s32.totalorder %s21, 0
      %p62 = por %p60, %p61
      %s63 = sadd.s32 %s23, 1
      %s64 = smul.u32 %s63, 8
      %s65 = sadd.s32 %s30, 1
      %s66 = smul.u32 %s65, 8
      %s67 = ssub.s32 %s22, %s34
      %s68 = ssub.s32 %s64, %s66
      %s69 = sor.u32 %s67, %s68
      %p70 = scmp.eq.s32.totalorder %s69, 0
      %s72 = sadd.s32 %s71, 1
      %s73 = scalar_select %p70, %s71, %s72
      %p76 = pneg %p70
      %p77 = scmp.eq.s32.totalorder %s15, 1
      %p78 = por %p76, %p77
      %p79 = scmp.ne.s32.totalorder %s71, %s74
      %p80 = scmp.eq.s32.totalorder %s15, 0
      %p81 = por %p79, %p80
      %p82 = scmp.ne.s32.totalorder %s71, %s74
      %p83 = scmp.eq.s32.totalorder %s20, 1
      %p84 = por %p82, %p83
      %p85 = scmp.ne.s32.totalorder %s74, %s75
      %p86 = scmp.eq.s32.totalorder %s20, 0
      %p87 = por %p85, %p86
      %p88 = scmp.ne.s32.totalorder %s74, %s75
      %p89 = scmp.eq.s32.totalorder %s21, 1
      %p90 = por %p88, %p89
      %p92 = scmp.ne.s32.totalorder %s75, %s91
      %p93 = scmp.eq.s32.totalorder %s21, 0
      %p94 = por %p92, %p93
      %s95 = sadd.s32 %s23, 1
      %s96 = smul.u32 %s95, 8
      %s97 = sadd.s32 %s96, 1
      %s98 = sadd.s32 %s30, 1
      %s99 = smul.u32 %s98, 8
      %s100 = sadd.s32 %s99, 1
      %s101 = ssub.s32 %s22, %s34
      %s102 = ssub.s32 %s97, %s100
      %s103 = sor.u32 %s101, %s102
      %p104 = scmp.eq.s32.totalorder %s103, 0
      %s106 = sadd.s32 %s105, 1
      %s107 = scalar_select %p104, %s105, %s106
      %p110 = pneg %p104
      %p111 = scmp.eq.s32.totalorder %s15, 1
      %p112 = por %p110, %p111
      %p113 = scmp.ne.s32.totalorder %s105, %s108
      %p114 = scmp.eq.s32.totalorder %s15, 0
      %p115 = por %p113, %p114
      %p116 = scmp.ne.s32.totalorder %s105, %s108
      %p117 = scmp.eq.s32.totalorder %s20, 1
      %p118 = por %p116, %p117
      %p119 = scmp.ne.s32.totalorder %s108, %s109
      %p120 = scmp.eq.s32.totalorder %s20, 0
      %p121 = por %p119, %p120
      %p122 = scmp.ne.s32.totalorder %s108, %s109
      %p123 = scmp.eq.s32.totalorder %s21, 1
      %p124 = por %p122, %p123
      %p126 = scmp.ne.s32.totalorder %s109, %s125
      %p127 = scmp.eq.s32.totalorder %s21, 0
      %p128 = por %p126, %p127
      %s129 = sadd.s32 %s23, 1
      %s130 = smul.u32 %s129, 8
      %s131 = sadd.s32 %s130, 2
      %s132 = sadd.s32 %s30, 1
      %s133 = smul.u32 %s132, 8
      %s134 = sadd.s32 %s133, 2
      %s135 = ssub.s32 %s22, %s34
      %s136 = ssub.s32 %s131, %s134
      %s137 = sor.u32 %s135, %s136
      %p138 = scmp.eq.s32.totalorder %s137, 0
      %s140 = sadd.s32 %s139, 1
      %s141 = scalar_select %p138, %s139, %s140
      %p144 = pneg %p138
      %p145 = scmp.eq.s32.totalorder %s15, 1
      %p146 = por %p144, %p145
      %p147 = scmp.ne.s32.totalorder %s139, %s142
      %p148 = scmp.eq.s32.totalorder %s15, 0
      %p149 = por %p147, %p148
      %p150 = scmp.ne.s32.totalorder %s139, %s142
      %p151 = scmp.eq.s32.totalorder %s20, 1
      %p152 = por %p150, %p151
      %p153 = scmp.ne.s32.totalorder %s142, %s143
      %p154 = scmp.eq.s32.totalorder %s20, 0
      %p155 = por %p153, %p154
      %p156 = scmp.ne.s32.totalorder %s142, %s143
      %p157 = scmp.eq.s32.totalorder %s21, 1
      %p158 = por %p156, %p157
      %p160 = scmp.ne.s32.totalorder %s143, %s159
      %p161 = scmp.eq.s32.totalorder %s21, 0
      %p162 = por %p160, %p161
      %s164 = sadd.s32 %s163, 1
      %p167 = scmp.eq.s32.totalorder %s15, 1
      %p168 = scmp.ne.s32.totalorder %s163, %s165
      %p169 = scmp.eq.s32.totalorder %s15, 0
      %p170 = por %p168, %p169
      %p171 = scmp.ne.s32.totalorder %s163, %s165
      %p172 = scmp.eq.s32.totalorder %s20, 1
      %p173 = por %p171, %p172
      %p174 = scmp.ne.s32.totalorder %s165, %s166
      %p175 = scmp.eq.s32.totalorder %s20, 0
      %p176 = por %p174, %p175
      %p177 = scmp.ne.s32.totalorder %s165, %s166
      %p178 = scmp.eq.s32.totalorder %s21, 1
      %p179 = por %p177, %p178
      %p181 = scmp.ne.s32.totalorder %s166, %s180
      %p182 = scmp.eq.s32.totalorder %s21, 0
      %p183 = por %p181, %p182
      %s185 = sadd.s32 %s184, 1
      %p188 = scmp.eq.s32.totalorder %s15, 1
      %p189 = scmp.ne.s32.totalorder %s184, %s186
      %p190 = scmp.eq.s32.totalorder %s15, 0
      %p191 = por %p189, %p190
      %p192 = scmp.ne.s32.totalorder %s184, %s186
      %p193 = scmp.eq.s32.totalorder %s20, 1
      %p194 = por %p192, %p193
      %p195 = scmp.ne.s32.totalorder %s186, %s187
      %p196 = scmp.eq.s32.totalorder %s20, 0
      %p197 = por %p195, %p196
      %p198 = scmp.ne.s32.totalorder %s186, %s187
      %p199 = scmp.eq.s32.totalorder %s21, 1
      %p200 = por %p198, %p199
      %p202 = scmp.ne.s32.totalorder %s187, %s201
      %p203 = scmp.eq.s32.totalorder %s21, 0
      %p204 = por %p202, %p203
      %s205 = ssub.s32 %s22, %s34
      %s206 = ssub.s32 %s23, %s30
      %s207 = sor.u32 %s205, %s206
      %p208 = scmp.eq.s32.totalorder %s207, 0
      %s210 = sadd.s32 %s209, 1
      %s211 = scalar_select %p208, %s209, %s210
      %p214 = pneg %p208
      %p215 = scmp.eq.s32.totalorder %s15, 1
      %p216 = por %p214, %p215
      %p217 = scmp.ne.s32.totalorder %s209, %s212
      %p218 = scmp.eq.s32.totalorder %s15, 0
      %p219 = por %p217, %p218
      %p220 = scmp.ne.s32.totalorder %s209, %s212
      %p221 = scmp.eq.s32.totalorder %s20, 1
      %p222 = por %p220, %p221
      %p223 = scmp.ne.s32.totalorder %s212, %s213
      %p224 = scmp.eq.s32.totalorder %s20, 0
      %p225 = por %p223, %p224
      %p226 = scmp.ne.s32.totalorder %s212, %s213
      %p227 = scmp.eq.s32.totalorder %s21, 1
      %p228 = por %p226, %p227
      %p230 = scmp.ne.s32.totalorder %s213, %s229
      %p231 = scmp.eq.s32.totalorder %s21, 0
      %p232 = por %p230, %p231
      %p233 = scmp.le.s32.totalorder 1, %s15
      %p234 = scmp.lt.s32.totalorder %s15, 3
      %p235 = pnand %p233, %p234
      %p236 = pneg %p235
      // Predicated region
      $region9: #{conv_bn_relu.1} parent=5 // pred_check
        _
      $region10: #{conv_bn_relu.1} parent=5 // pred_check_branch
        %238 = sbr.rel (%p235) target = $region12
      $region11: #{conv_bn_relu.1} parent=5 // pred_region
        %s239 = ssub.s32 %s15, 1
        // Predicated region
        $region13: #{conv_bn_relu.1} parent=11 // pred_check
          %p240 = pneg %p176
        $region14: #{conv_bn_relu.1} parent=11 // pred_check_branch
          %242 = sbr.rel (%p240) target = $region16
        $region15: #{conv_bn_relu.1} parent=11 // pred_region
          _
        $region16: #{conv_bn_relu.1} parent=11 // pred_fallthru
          _
        // Predicated region
        $region17: #{conv_bn_relu.1} parent=11 // pred_check
          %p243 = pneg %p197
        $region18: #{conv_bn_relu.1} parent=11 // pred_check_branch
          %245 = sbr.rel (%p243) target = $region20
        $region19: #{conv_bn_relu.1} parent=11 // pred_region
          _
        $region20: #{conv_bn_relu.1} parent=11 // pred_fallthru
          _
      $region12: #{conv_bn_relu.1} parent=5 // pred_fallthru
        _
      %p246 = scmp.lt.s32.totalorder %s15, 2
      // Predicated region
      $region21: #{conv_bn_relu.1} parent=5 // pred_check
        %p247 = pneg %p246
      $region22: #{conv_bn_relu.1} parent=5 // pred_check_branch
        %249 = sbr.rel (%p247) target = $region24
      $region23: #{conv_bn_relu.1} parent=5 // pred_region
        // Predicated region
        $region25: #{conv_bn_relu.1} parent=23 // pred_check
          %p250 = pneg %p49
        $region26: #{conv_bn_relu.1} parent=23 // pred_check_branch
          %252 = sbr.rel (%p250) target = $region28
        $region27: #{conv_bn_relu.1} parent=23 // pred_region
          %s253 = smul.u32 8, %s23
          %s254 = ssub.s32 11, %s253
          %p255 = scmp.lt.s32.totalorder %s254, 8
          %s256 = scalar_select %p255, %s254, 8
          %s257 = smul.u32 64, %s256
          %s258 = smul.u32 %s257, 2
          %s259 = smul.u32 %s258, 2
          %p260 = scmp.lt.s32.totalorder %s22, 1
          %s261 = scalar_select %p260, %s22, 1
          %p262 = scmp.lt.s32.totalorder %s253, 10
          %s263 = scalar_select %p262, %s253, 10
          %s264 = smul.addr %s263, 4
          %s265 = smul.addr %s261, 44
          %s266 = sadd.s32 %s264, %s265
          %s267 = smul.addr %s266, 4
          %s268 = scalar_lea.vmem %s0, %s267
          %s269 = smul.u32 8, %s23
          %s270 = ssub.s32 11, %s269
          %p271 = scmp.lt.s32.totalorder %s270, 8
          %s272 = scalar_select %p271, %s270, 8
          %s273 = smul.u32 64, %s272
          %s274 = smul.u32 %s273, 2
          %s275 = smul.u32 %s274, 2
        $region28: #{conv_bn_relu.1} parent=23 // pred_fallthru
          _
        // Predicated region
        $region29: #{conv_bn_relu.1} parent=23 // pred_check
          %p276 = pneg %p81
        $region30: #{conv_bn_relu.1} parent=23 // pred_check_branch
          %278 = sbr.rel (%p276) target = $region32
        $region31: #{conv_bn_relu.1} parent=23 // pred_region
          %s279 = sadd.s32 %s23, 1
          %s280 = smul.u32 %s279, 8
          %p281 = scmp.lt.s32.totalorder %s22, 1
          %s282 = scalar_select %p281, %s22, 1
          %p283 = scmp.lt.s32.totalorder %s280, 10
          %s284 = scalar_select %p283, %s280, 10
          %s285 = smul.addr %s284, 4
          %s286 = smul.addr %s282, 44
          %s287 = sadd.s32 %s285, %s286
          %s288 = smul.addr %s287, 4
          %s289 = scalar_lea.vmem %s1, %s288
          %s290 = sadd.s32 %s23, 1
          %s291 = smul.u32 %s290, 8
        $region32: #{conv_bn_relu.1} parent=23 // pred_fallthru
          _
        // Predicated region
        $region33: #{conv_bn_relu.1} parent=23 // pred_check
          %p292 = pneg %p115
        $region34: #{conv_bn_relu.1} parent=23 // pred_check_branch
          %294 = sbr.rel (%p292) target = $region36
        $region35: #{conv_bn_relu.1} parent=23 // pred_region
          %s295 = sadd.s32 %s23, 1
          %s296 = smul.u32 %s295, 8
          %s297 = sadd.s32 %s296, 1
          %p298 = scmp.lt.s32.totalorder %s22, 1
          %s299 = scalar_select %p298, %s22, 1
          %p300 = scmp.lt.s32.totalorder %s297, 10
          %s301 = scalar_select %p300, %s297, 10
          %s302 = smul.addr %s301, 4
          %s303 = smul.addr %s299, 44
          %s304 = sadd.s32 %s302, %s303
          %s305 = smul.addr %s304, 4
          %s306 = scalar_lea.vmem %s2, %s305
          %s307 = sadd.s32 %s23, 1
          %s308 = smul.u32 %s307, 8
          %s309 = sadd.s32 %s308, 1
        $region36: #{conv_bn_relu.1} parent=23 // pred_fallthru
          _
        // Predicated region
        $region37: #{conv_bn_relu.1} parent=23 // pred_check
          %p310 = pneg %p149
        $region38: #{conv_bn_relu.1} parent=23 // pred_check_branch
          %312 = sbr.rel (%p310) target = $region40
        $region39: #{conv_bn_relu.1} parent=23 // pred_region
          %s313 = sadd.s32 %s23, 1
          %s314 = smul.u32 %s313, 8
          %s315 = sadd.s32 %s314, 2
          %p316 = scmp.lt.s32.totalorder %s22, 1
          %s317 = scalar_select %p316, %s22, 1
          %p318 = scmp.lt.s32.totalorder %s315, 10
          %s319 = scalar_select %p318, %s315, 10
          %s320 = smul.addr %s319, 4
          %s321 = smul.addr %s317, 44
          %s322 = sadd.s32 %s320, %s321
          %s323 = smul.addr %s322, 4
          %s324 = scalar_lea.vmem %s3, %s323
          %s325 = sadd.s32 %s23, 1
          %s326 = smul.u32 %s325, 8
          %s327 = sadd.s32 %s326, 2
        $region40: #{conv_bn_relu.1} parent=23 // pred_fallthru
          _
      $region24: #{conv_bn_relu.1} parent=5 // pred_fallthru
        _
      %p328 = scmp.le.s32.totalorder 1, %s15
      %p329 = scmp.lt.s32.totalorder %s15, 3
      %p330 = pnand %p328, %p329
      %p331 = pneg %p330
      // Predicated region
      $region41: #{conv_bn_relu.1} parent=5 // pred_check
        _
      $region42: #{conv_bn_relu.1} parent=5 // pred_check_branch
        %333 = sbr.rel (%p330) target = $region44
      $region43: #{conv_bn_relu.1} parent=5 // pred_region
        %s334 = ssub.s32 %s15, 1
        %s335 = smul.u32 8, %s25
        %s336 = ssub.s32 11, %s335
        %p337 = scmp.lt.s32.totalorder %s336, 8
        %s338 = scalar_select %p337, %s336, 8
        %s339 = smul.u32 64, %s338
        %s340 = smul.u32 %s339, 2
        %s341 = smul.u32 %s340, 2
        %p342 = scmp.lt.s32.totalorder %s24, 1
        %s343 = scalar_select %p342, %s24, 1
        %p344 = scmp.lt.s32.totalorder %s335, 10
        %s345 = scalar_select %p344, %s335, 10
        %s346 = smul.addr %s345, 4
        %s347 = smul.addr %s343, 44
        %s348 = sadd.s32 %s346, %s347
        %s349 = smul.addr %s348, 4
        %s350 = scalar_lea.vmem %s0, %s349
        %p351 = pneg %p55
        %p352 = pneg %p52
        %s353 = sadd.s32 %s25, 1
        %s354 = smul.u32 %s353, 8
        %p355 = scmp.lt.s32.totalorder %s24, 1
        %s356 = scalar_select %p355, %s24, 1
        %p357 = scmp.lt.s32.totalorder %s354, 10
        %s358 = scalar_select %p357, %s354, 10
        %s359 = smul.addr %s358, 4
        %s360 = smul.addr %s356, 44
        %s361 = sadd.s32 %s359, %s360
        %s362 = smul.addr %s361, 4
        %s363 = scalar_lea.vmem %s1, %s362
        %p364 = pneg %p87
        %p365 = pneg %p84
        %s366 = sadd.s32 %s25, 1
        %s367 = smul.u32 %s366, 8
        %s368 = sadd.s32 %s367, 1
        %p369 = scmp.lt.s32.totalorder %s24, 1
        %s370 = scalar_select %p369, %s24, 1
        %p371 = scmp.lt.s32.totalorder %s368, 10
        %s372 = scalar_select %p371, %s368, 10
        %s373 = smul.addr %s372, 4
        %s374 = smul.addr %s370, 44
        %s375 = sadd.s32 %s373, %s374
        %s376 = smul.addr %s375, 4
        %s377 = scalar_lea.vmem %s2, %s376
        %p378 = pneg %p121
        %p379 = pneg %p118
        %s380 = sadd.s32 %s25, 1
        %s381 = smul.u32 %s380, 8
        %s382 = sadd.s32 %s381, 2
        %p383 = scmp.lt.s32.totalorder %s24, 1
        %s384 = scalar_select %p383, %s24, 1
        %p385 = scmp.lt.s32.totalorder %s382, 10
        %s386 = scalar_select %p385, %s382, 10
        %s387 = smul.addr %s386, 4
        %s388 = smul.addr %s384, 44
        %s389 = sadd.s32 %s387, %s388
        %s390 = smul.addr %s389, 4
        %s391 = scalar_lea.vmem %s3, %s390
        %p392 = pneg %p155
        %p393 = pneg %p152
        %p394 = pneg %p176
        %p395 = pneg %p173
        %p396 = pneg %p197
        %p397 = pneg %p194
        %p398 = pneg %p225
        %p399 = pneg %p222
        %s400 = sand.u32 %s212, 1
        %s401 = scalar_lea.sflag [#allocation3], %s400
        %s402 = sand.u32 %s212, 1
        %s403 = smul.addr %s402, 32
        %s404 = scalar_lea.vmem [#allocation2], %s403
        %s405 = smul.u32 8, %s25
        %s406 = ssub.s32 11, %s405
        %p407 = scmp.lt.s32.totalorder %s406, 8
        %s408 = scalar_select %p407, %s406, 8
        %s409 = smul.u32 64, %s408
        %s410 = smul.u32 %s409, 2
        %s411 = smul.u32 %s410, 2
        %p412 = scmp.lt.s32.totalorder %s24, 1
        %s413 = scalar_select %p412, %s24, 1
        %p414 = scmp.lt.s32.totalorder %s405, 10
        %s415 = scalar_select %p414, %s405, 10
        %s416 = smul.addr %s415, 4
        %s417 = smul.addr %s413, 44
        %s418 = sadd.s32 %s416, %s417
        %s419 = smul.addr %s418, 4
        %s420 = scalar_lea.vmem %s0, %s419
        %s421 = smul.u32 8, %s25
        %s422 = ssub.s32 11, %s421
        %p423 = scmp.lt.s32.totalorder %s422, 8
        %s424 = scalar_select %p423, %s422, 8
        %s425 = smul.u32 64, %s424
        %s426 = smul.u32 %s425, 2
        %s427 = smul.u32 %s426, 2
        %s428 = sadd.s32 %s25, 1
        %s429 = smul.u32 %s428, 8
        %p430 = scmp.lt.s32.totalorder %s24, 1
        %s431 = scalar_select %p430, %s24, 1
        %p432 = scmp.lt.s32.totalorder %s429, 10
        %s433 = scalar_select %p432, %s429, 10
        %s434 = smul.addr %s433, 4
        %s435 = smul.addr %s431, 44
        %s436 = sadd.s32 %s434, %s435
        %s437 = smul.addr %s436, 4
        %s438 = scalar_lea.vmem %s1, %s437
        %s439 = sadd.s32 %s25, 1
        %s440 = smul.u32 %s439, 8
        %s441 = sadd.s32 %s25, 1
        %s442 = smul.u32 %s441, 8
        %s443 = sadd.s32 %s442, 1
        %p444 = scmp.lt.s32.totalorder %s24, 1
        %s445 = scalar_select %p444, %s24, 1
        %p446 = scmp.lt.s32.totalorder %s443, 10
        %s447 = scalar_select %p446, %s443, 10
        %s448 = smul.addr %s447, 4
        %s449 = smul.addr %s445, 44
        %s450 = sadd.s32 %s448, %s449
        %s451 = smul.addr %s450, 4
        %s452 = scalar_lea.vmem %s2, %s451
        %s453 = sadd.s32 %s25, 1
        %s454 = smul.u32 %s453, 8
        %s455 = sadd.s32 %s454, 1
        %s456 = sadd.s32 %s25, 1
        %s457 = smul.u32 %s456, 8
        %s458 = sadd.s32 %s457, 2
        %p459 = scmp.lt.s32.totalorder %s24, 1
        %s460 = scalar_select %p459, %s24, 1
        %p461 = scmp.lt.s32.totalorder %s458, 10
        %s462 = scalar_select %p461, %s458, 10
        %s463 = smul.addr %s462, 4
        %s464 = smul.addr %s460, 44
        %s465 = sadd.s32 %s463, %s464
        %s466 = smul.addr %s465, 4
        %s467 = scalar_lea.vmem %s3, %s466
        %s468 = sadd.s32 %s25, 1
        %s469 = smul.u32 %s468, 8
        %s470 = sadd.s32 %s469, 2
        %s471 = smul.u32 8, %s25
        %v473 = vld [vmem:[%s420] sm:$0xf]
        %v474 = vld [vmem:[%s420 + $0x4] sm:$0x3]
        %v475 = vld [vmem:[%s420 + $0x8] sm:$0xf]
        %v476 = vld [vmem:[%s420 + $0xc] sm:$0x3]
        %v477 = vld [vmem:[%s420 + $0x10] sm:$0xf]
        %v478 = vld [vmem:[%s420 + $0x14] sm:$0x3]
        %v479 = vld [vmem:[%s420 + $0x18] sm:$0xf]
        %v480 = vld [vmem:[%s420 + $0x1c] sm:$0x3]
        %v481 = vld [vmem:[%s420 + $0x20] sm:$0xf]
        %v482 = vld [vmem:[%s420 + $0x24] sm:$0x3]
        %v483 = vld [vmem:[%s420 + $0x28] sm:$0xf]
        %v484 = vld [vmem:[%s420 + $0x2c] sm:$0x3]
        %v485 = vld [vmem:[%s420 + $0x30] sm:$0xf]
        %v486 = vld [vmem:[%s420 + $0x34] sm:$0x3]
        %v487 = vld [vmem:[%s420 + $0x38] sm:$0xf]
        %v488 = vld [vmem:[%s420 + $0x3c] sm:$0x3]
        %v489 = vld [vmem:[%s420 + $0x40] sm:$0xf]
        %v490 = vld [vmem:[%s420 + $0x44] sm:$0x3]
        %v491 = vld [vmem:[%s420 + $0x48] sm:$0xf]
        %v492 = vld [vmem:[%s420 + $0x4c] sm:$0x3]
        %v493 = vld [vmem:[%s420 + $0x50] sm:$0xf]
        %v494 = vld [vmem:[%s420 + $0x54] sm:$0x3]
        %v495 = vld [vmem:[%s420 + $0x58] sm:$0xf]
        %v496 = vld [vmem:[%s420 + $0x5c] sm:$0x3]
        %v497 = vld [vmem:[%s420 + $0x60] sm:$0xf]
        %v498 = vld [vmem:[%s420 + $0x64] sm:$0x3]
        %v499 = vld [vmem:[%s420 + $0x68] sm:$0xf]
        %v500 = vld [vmem:[%s420 + $0x6c] sm:$0x3]
        %v501 = vld [vmem:[%s420 + $0x70] sm:$0xf]
        %v502 = vld [vmem:[%s420 + $0x74] sm:$0x3]
        %v503 = vld [vmem:[%s420 + $0x78] sm:$0xf]
        %v504 = vld [vmem:[%s420 + $0x7c] sm:$0x3]
        %v505 = vld [vmem:[%s438] sm:$0xf]
        %v506 = vld [vmem:[%s438 + $0x4] sm:$0x3]
        %v507 = vld [vmem:[%s438 + $0x8] sm:$0xf]
        %v508 = vld [vmem:[%s438 + $0xc] sm:$0x3]
        %v509 = vld [vmem:[%s452] sm:$0xf]
        %v510 = vld [vmem:[%s452 + $0x4] sm:$0x3]
        %v511 = vld [vmem:[%s452 + $0x8] sm:$0xf]
        %v512 = vld [vmem:[%s452 + $0xc] sm:$0x3]
        %v513 = vld [vmem:[%s467] sm:$0xf]
        %v514 = vld [vmem:[%s467 + $0x4] sm:$0x3]
        %vm515 = vsmask.f32 3328
        %vm516 = vsmask.f32 7440
        %vm517 = vmor %vm515, %vm516
        %v519 = vshrl.u32 %v473, 16
        %v521 = vrot.slane %v519, 4
        %v522 = vshll.u32 %v473, 16
        %v524 = vrot.slane %v522, 5
        %v525 = vor.u32 %v521, %v524
        %v526 = vrot.slane %v525, 4
        %v528 = vshll.u32 %v474, 16
        %v530 = vrot.slane %v528, 5
        %v531 = vsel %vm517, %v526, %v530
        %v533 = vshrl.u32 %v477, 16
        %v535 = vrot.slane %v533, 4
        %v536 = vshll.u32 %v477, 16
        %v538 = vrot.slane %v536, 5
        %v539 = vor.u32 %v535, %v538
        %v540 = vrot.slane %v539, 4
        %v542 = vshll.u32 %v478, 16
        %v544 = vrot.slane %v542, 5
        %v545 = vsel %vm517, %v540, %v544
        %v547 = vshrl.u32 %v481, 16
        %v549 = vrot.slane %v547, 4
        %v550 = vshll.u32 %v481, 16
        %v552 = vrot.slane %v550, 5
        %v553 = vor.u32 %v549, %v552
        %v554 = vrot.slane %v553, 4
        %v556 = vshll.u32 %v482, 16
        %v558 = vrot.slane %v556, 5
        %v559 = vsel %vm517, %v554, %v558
        %v561 = vshrl.u32 %v485, 16
        %v563 = vrot.slane %v561, 4
        %v564 = vshll.u32 %v485, 16
        %v566 = vrot.slane %v564, 5
        %v567 = vor.u32 %v563, %v566
        %v568 = vrot.slane %v567, 4
        %v570 = vshll.u32 %v486, 16
        %v572 = vrot.slane %v570, 5
        %v573 = vsel %vm517, %v568, %v572
        %v575 = vshrl.u32 %v489, 16
        %v577 = vrot.slane %v575, 4
        %v578 = vshll.u32 %v489, 16
        %v580 = vrot.slane %v578, 5
        %v581 = vor.u32 %v577, %v580
        %v582 = vrot.slane %v581, 4
        %v584 = vshll.u32 %v490, 16
        %v586 = vrot.slane %v584, 5
        %v587 = vsel %vm517, %v582, %v586
        %v589 = vshrl.u32 %v493, 16
        %v591 = vrot.slane %v589, 4
        %v592 = vshll.u32 %v493, 16
        %v594 = vrot.slane %v592, 5
        %v595 = vor.u32 %v591, %v594
        %v596 = vrot.slane %v595, 4
        %v598 = vshll.u32 %v494, 16
        %v600 = vrot.slane %v598, 5
        %v601 = vsel %vm517, %v596, %v600
        %v603 = vshrl.u32 %v497, 16
        %v605 = vrot.slane %v603, 4
        %v606 = vshll.u32 %v497, 16
        %v608 = vrot.slane %v606, 5
        %v609 = vor.u32 %v605, %v608
        %v610 = vrot.slane %v609, 4
        %v612 = vshll.u32 %v498, 16
        %v614 = vrot.slane %v612, 5
        %v615 = vsel %vm517, %v610, %v614
        %v617 = vshrl.u32 %v501, 16
        %v619 = vrot.slane %v617, 4
        %v620 = vshll.u32 %v501, 16
        %v622 = vrot.slane %v620, 5
        %v623 = vor.u32 %v619, %v622
        %v624 = vrot.slane %v623, 4
        %v626 = vshll.u32 %v502, 16
        %v628 = vrot.slane %v626, 5
        %v629 = vsel %vm517, %v624, %v628
        %vm646 = vcmask 1042432
        %vm647 = vcmask 1046532
        %vm648 = vmor %vm646, %vm647
        %v649 = vrot.slane %v473, 5
        %v650 = vrot.slane %v649, 4
        %v651 = vrot.slane %v474, 5
        %v652 = vsel %vm648, %v650, %v651
        %v653 = vrot.slane %v477, 5
        %v654 = vrot.slane %v653, 4
        %v655 = vrot.slane %v478, 5
        %v656 = vsel %vm648, %v654, %v655
        %v657 = vrot.slane %v481, 5
        %v658 = vrot.slane %v657, 4
        %v659 = vrot.slane %v482, 5
        %v660 = vsel %vm648, %v658, %v659
        %v661 = vrot.slane %v485, 5
        %v662 = vrot.slane %v661, 4
        %v663 = vrot.slane %v486, 5
        %v664 = vsel %vm648, %v662, %v663
        %v665 = vrot.slane %v489, 5
        %v666 = vrot.slane %v665, 4
        %v667 = vrot.slane %v490, 5
        %v668 = vsel %vm648, %v666, %v667
        %v669 = vrot.slane %v493, 5
        %v670 = vrot.slane %v669, 4
        %v671 = vrot.slane %v494, 5
        %v672 = vsel %vm648, %v670, %v671
        %v673 = vrot.slane %v497, 5
        %v674 = vrot.slane %v673, 4
        %v675 = vrot.slane %v498, 5
        %v676 = vsel %vm648, %v674, %v675
        %v677 = vrot.slane %v501, 5
        %v678 = vrot.slane %v677, 4
        %v679 = vrot.slane %v502, 5
        %v680 = vsel %vm648, %v678, %v679
        %vm681 = vsmask.f32 2304
        %vm682 = vsmask.f32 6416
        %vm683 = vmor %vm681, %vm682
        %v684 = vrot.slane %v519, 5
        %v685 = vrot.slane %v522, 6
        %v686 = vor.u32 %v684, %v685
        %v687 = vrot.slane %v686, 4
        %v688 = vshrl.u32 %v474, 16
        %v690 = vrot.slane %v688, 5
        %v691 = vrot.slane %v528, 6
        %v692 = vor.u32 %v690, %v691
        %v693 = vsel %vm683, %v687, %v692
        %v694 = vrot.slane %v533, 5
        %v695 = vrot.slane %v536, 6
        %v696 = vor.u32 %v694, %v695
        %v697 = vrot.slane %v696, 4
        %v698 = vshrl.u32 %v478, 16
        %v700 = vrot.slane %v698, 5
        %v701 = vrot.slane %v542, 6
        %v702 = vor.u32 %v700, %v701
        %v703 = vsel %vm683, %v697, %v702
        %v704 = vrot.slane %v547, 5
        %v705 = vrot.slane %v550, 6
        %v706 = vor.u32 %v704, %v705
        %v707 = vrot.slane %v706, 4
        %v708 = vshrl.u32 %v482, 16
        %v710 = vrot.slane %v708, 5
        %v711 = vrot.slane %v556, 6
        %v712 = vor.u32 %v710, %v711
        %v713 = vsel %vm683, %v707, %v712
        %v714 = vrot.slane %v561, 5
        %v715 = vrot.slane %v564, 6
        %v716 = vor.u32 %v714, %v715
        %v717 = vrot.slane %v716, 4
        %v718 = vshrl.u32 %v486, 16
        %v720 = vrot.slane %v718, 5
        %v721 = vrot.slane %v570, 6
        %v722 = vor.u32 %v720, %v721
        %v723 = vsel %vm683, %v717, %v722
        %v724 = vrot.slane %v575, 5
        %v725 = vrot.slane %v578, 6
        %v726 = vor.u32 %v724, %v725
        %v727 = vrot.slane %v726, 4
        %v728 = vshrl.u32 %v490, 16
        %v730 = vrot.slane %v728, 5
        %v731 = vrot.slane %v584, 6
        %v732 = vor.u32 %v730, %v731
        %v733 = vsel %vm683, %v727, %v732
        %v734 = vrot.slane %v589, 5
        %v735 = vrot.slane %v592, 6
        %v736 = vor.u32 %v734, %v735
        %v737 = vrot.slane %v736, 4
        %v738 = vshrl.u32 %v494, 16
        %v740 = vrot.slane %v738, 5
        %v741 = vrot.slane %v598, 6
        %v742 = vor.u32 %v740, %v741
        %v743 = vsel %vm683, %v737, %v742
        %v744 = vrot.slane %v603, 5
        %v745 = vrot.slane %v606, 6
        %v746 = vor.u32 %v744, %v745
        %v747 = vrot.slane %v746, 4
        %v748 = vshrl.u32 %v498, 16
        %v750 = vrot.slane %v748, 5
        %v751 = vrot.slane %v612, 6
        %v752 = vor.u32 %v750, %v751
        %v753 = vsel %vm683, %v747, %v752
        %v754 = vrot.slane %v617, 5
        %v755 = vrot.slane %v620, 6
        %v756 = vor.u32 %v754, %v755
        %v757 = vrot.slane %v756, 4
        %v758 = vshrl.u32 %v502, 16
        %v760 = vrot.slane %v758, 5
        %v761 = vrot.slane %v626, 6
        %v762 = vor.u32 %v760, %v761
        %v763 = vsel %vm683, %v757, %v762
        %v765 = vshrl.u32 %v475, 16
        %v767 = vrot.slane %v765, 4
        %v768 = vshll.u32 %v475, 16
        %v770 = vrot.slane %v768, 5
        %v771 = vor.u32 %v767, %v770
        %v772 = vrot.slane %v771, 4
        %v774 = vshll.u32 %v476, 16
        %v776 = vrot.slane %v774, 5
        %v777 = vsel %vm517, %v772, %v776
        %v779 = vshrl.u32 %v479, 16
        %v781 = vrot.slane %v779, 4
        %v782 = vshll.u32 %v479, 16
        %v784 = vrot.slane %v782, 5
        %v785 = vor.u32 %v781, %v784
        %v786 = vrot.slane %v785, 4
        %v788 = vshll.u32 %v480, 16
        %v790 = vrot.slane %v788, 5
        %v791 = vsel %vm517, %v786, %v790
        %v793 = vshrl.u32 %v483, 16
        %v795 = vrot.slane %v793, 4
        %v796 = vshll.u32 %v483, 16
        %v798 = vrot.slane %v796, 5
        %v799 = vor.u32 %v795, %v798
        %v800 = vrot.slane %v799, 4
        %v802 = vshll.u32 %v484, 16
        %v804 = vrot.slane %v802, 5
        %v805 = vsel %vm517, %v800, %v804
        %v807 = vshrl.u32 %v487, 16
        %v809 = vrot.slane %v807, 4
        %v810 = vshll.u32 %v487, 16
        %v812 = vrot.slane %v810, 5
        %v813 = vor.u32 %v809, %v812
        %v814 = vrot.slane %v813, 4
        %v816 = vshll.u32 %v488, 16
        %v818 = vrot.slane %v816, 5
        %v819 = vsel %vm517, %v814, %v818
        %v821 = vshrl.u32 %v491, 16
        %v823 = vrot.slane %v821, 4
        %v824 = vshll.u32 %v491, 16
        %v826 = vrot.slane %v824, 5
        %v827 = vor.u32 %v823, %v826
        %v828 = vrot.slane %v827, 4
        %v830 = vshll.u32 %v492, 16
        %v832 = vrot.slane %v830, 5
        %v833 = vsel %vm517, %v828, %v832
        %v835 = vshrl.u32 %v495, 16
        %v837 = vrot.slane %v835, 4
        %v838 = vshll.u32 %v495, 16
        %v840 = vrot.slane %v838, 5
        %v841 = vor.u32 %v837, %v840
        %v842 = vrot.slane %v841, 4
        %v844 = vshll.u32 %v496, 16
        %v846 = vrot.slane %v844, 5
        %v847 = vsel %vm517, %v842, %v846
        %v849 = vshrl.u32 %v499, 16
        %v851 = vrot.slane %v849, 4
        %v852 = vshll.u32 %v499, 16
        %v854 = vrot.slane %v852, 5
        %v855 = vor.u32 %v851, %v854
        %v856 = vrot.slane %v855, 4
        %v858 = vshll.u32 %v500, 16
        %v860 = vrot.slane %v858, 5
        %v861 = vsel %vm517, %v856, %v860
        %v863 = vshrl.u32 %v503, 16
        %v865 = vrot.slane %v863, 4
        %v866 = vshll.u32 %v503, 16
        %v868 = vrot.slane %v866, 5
        %v869 = vor.u32 %v865, %v868
        %v870 = vrot.slane %v869, 4
        %v872 = vshll.u32 %v504, 16
        %v874 = vrot.slane %v872, 5
        %v875 = vsel %vm517, %v870, %v874
        %v892 = vrot.slane %v475, 5
        %v893 = vrot.slane %v892, 4
        %v894 = vrot.slane %v476, 5
        %v895 = vsel %vm648, %v893, %v894
        %v896 = vrot.slane %v479, 5
        %v897 = vrot.slane %v896, 4
        %v898 = vrot.slane %v480, 5
        %v899 = vsel %vm648, %v897, %v898
        %v900 = vrot.slane %v483, 5
        %v901 = vrot.slane %v900, 4
        %v902 = vrot.slane %v484, 5
        %v903 = vsel %vm648, %v901, %v902
        %v904 = vrot.slane %v487, 5
        %v905 = vrot.slane %v904, 4
        %v906 = vrot.slane %v488, 5
        %v907 = vsel %vm648, %v905, %v906
        %v908 = vrot.slane %v491, 5
        %v909 = vrot.slane %v908, 4
        %v910 = vrot.slane %v492, 5
        %v911 = vsel %vm648, %v909, %v910
        %v912 = vrot.slane %v495, 5
        %v913 = vrot.slane %v912, 4
        %v914 = vrot.slane %v496, 5
        %v915 = vsel %vm648, %v913, %v914
        %v916 = vrot.slane %v499, 5
        %v917 = vrot.slane %v916, 4
        %v918 = vrot.slane %v500, 5
        %v919 = vsel %vm648, %v917, %v918
        %v920 = vrot.slane %v503, 5
        %v921 = vrot.slane %v920, 4
        %v922 = vrot.slane %v504, 5
        %v923 = vsel %vm648, %v921, %v922
        %v924 = vrot.slane %v765, 5
        %v925 = vrot.slane %v768, 6
        %v926 = vor.u32 %v924, %v925
        %v927 = vrot.slane %v926, 4
        %v928 = vshrl.u32 %v476, 16
        %v930 = vrot.slane %v928, 5
        %v931 = vrot.slane %v774, 6
        %v932 = vor.u32 %v930, %v931
        %v933 = vsel %vm683, %v927, %v932
        %v934 = vrot.slane %v779, 5
        %v935 = vrot.slane %v782, 6
        %v936 = vor.u32 %v934, %v935
        %v937 = vrot.slane %v936, 4
        %v938 = vshrl.u32 %v480, 16
        %v940 = vrot.slane %v938, 5
        %v941 = vrot.slane %v788, 6
        %v942 = vor.u32 %v940, %v941
        %v943 = vsel %vm683, %v937, %v942
        %v944 = vrot.slane %v793, 5
        %v945 = vrot.slane %v796, 6
        %v946 = vor.u32 %v944, %v945
        %v947 = vrot.slane %v946, 4
        %v948 = vshrl.u32 %v484, 16
        %v950 = vrot.slane %v948, 5
        %v951 = vrot.slane %v802, 6
        %v952 = vor.u32 %v950, %v951
        %v953 = vsel %vm683, %v947, %v952
        %v954 = vrot.slane %v807, 5
        %v955 = vrot.slane %v810, 6
        %v956 = vor.u32 %v954, %v955
        %v957 = vrot.slane %v956, 4
        %v958 = vshrl.u32 %v488, 16
        %v960 = vrot.slane %v958, 5
        %v961 = vrot.slane %v816, 6
        %v962 = vor.u32 %v960, %v961
        %v963 = vsel %vm683, %v957, %v962
        %v964 = vrot.slane %v821, 5
        %v965 = vrot.slane %v824, 6
        %v966 = vor.u32 %v964, %v965
        %v967 = vrot.slane %v966, 4
        %v968 = vshrl.u32 %v492, 16
        %v970 = vrot.slane %v968, 5
        %v971 = vrot.slane %v830, 6
        %v972 = vor.u32 %v970, %v971
        %v973 = vsel %vm683, %v967, %v972
        %v974 = vrot.slane %v835, 5
        %v975 = vrot.slane %v838, 6
        %v976 = vor.u32 %v974, %v975
        %v977 = vrot.slane %v976, 4
        %v978 = vshrl.u32 %v496, 16
        %v980 = vrot.slane %v978, 5
        %v981 = vrot.slane %v844, 6
        %v982 = vor.u32 %v980, %v981
        %v983 = vsel %vm683, %v977, %v982
        %v984 = vrot.slane %v849, 5
        %v985 = vrot.slane %v852, 6
        %v986 = vor.u32 %v984, %v985
        %v987 = vrot.slane %v986, 4
        %v988 = vshrl.u32 %v500, 16
        %v990 = vrot.slane %v988, 5
        %v991 = vrot.slane %v858, 6
        %v992 = vor.u32 %v990, %v991
        %v993 = vsel %vm683, %v987, %v992
        %v994 = vrot.slane %v863, 5
        %v995 = vrot.slane %v866, 6
        %v996 = vor.u32 %v994, %v995
        %v997 = vrot.slane %v996, 4
        %v998 = vshrl.u32 %v504, 16
        %v1000 = vrot.slane %v998, 5
        %v1001 = vrot.slane %v872, 6
        %v1002 = vor.u32 %v1000, %v1001
        %v1003 = vsel %vm683, %v997, %v1002
        %v1005 = vshrl.u32 %v505, 16
        %v1007 = vrot.slane %v1005, 4
        %v1008 = vshll.u32 %v505, 16
        %v1010 = vrot.slane %v1008, 5
        %v1011 = vor.u32 %v1007, %v1010
        %v1012 = vrot.slane %v1011, 4
        %v1014 = vshll.u32 %v506, 16
        %v1016 = vrot.slane %v1014, 5
        %v1017 = vsel %vm517, %v1012, %v1016
        %v1020 = vrot.slane %v505, 5
        %v1021 = vrot.slane %v1020, 4
        %v1022 = vrot.slane %v506, 5
        %v1023 = vsel %vm648, %v1021, %v1022
        %v1024 = vrot.slane %v1005, 5
        %v1025 = vrot.slane %v1008, 6
        %v1026 = vor.u32 %v1024, %v1025
        %v1027 = vrot.slane %v1026, 4
        %v1028 = vshrl.u32 %v506, 16
        %v1030 = vrot.slane %v1028, 5
        %v1031 = vrot.slane %v1014, 6
        %v1032 = vor.u32 %v1030, %v1031
        %v1033 = vsel %vm683, %v1027, %v1032
        %v1035 = vshrl.u32 %v507, 16
        %v1037 = vrot.slane %v1035, 4
        %v1038 = vshll.u32 %v507, 16
        %v1040 = vrot.slane %v1038, 5
        %v1041 = vor.u32 %v1037, %v1040
        %v1042 = vrot.slane %v1041, 4
        %v1044 = vshll.u32 %v508, 16
        %v1046 = vrot.slane %v1044, 5
        %v1047 = vsel %vm517, %v1042, %v1046
        %v1050 = vrot.slane %v507, 5
        %v1051 = vrot.slane %v1050, 4
        %v1052 = vrot.slane %v508, 5
        %v1053 = vsel %vm648, %v1051, %v1052
        %v1054 = vrot.slane %v1035, 5
        %v1055 = vrot.slane %v1038, 6
        %v1056 = vor.u32 %v1054, %v1055
        %v1057 = vrot.slane %v1056, 4
        %v1058 = vshrl.u32 %v508, 16
        %v1060 = vrot.slane %v1058, 5
        %v1061 = vrot.slane %v1044, 6
        %v1062 = vor.u32 %v1060, %v1061
        %v1063 = vsel %vm683, %v1057, %v1062
        %v1065 = vshrl.u32 %v509, 16
        %v1067 = vrot.slane %v1065, 4
        %v1068 = vshll.u32 %v509, 16
        %v1070 = vrot.slane %v1068, 5
        %v1071 = vor.u32 %v1067, %v1070
        %v1072 = vrot.slane %v1071, 4
        %v1074 = vshll.u32 %v510, 16
        %v1076 = vrot.slane %v1074, 5
        %v1077 = vsel %vm517, %v1072, %v1076
        %v1080 = vrot.slane %v509, 5
        %v1081 = vrot.slane %v1080, 4
        %v1082 = vrot.slane %v510, 5
        %v1083 = vsel %vm648, %v1081, %v1082
        %v1084 = vrot.slane %v1065, 5
        %v1085 = vrot.slane %v1068, 6
        %v1086 = vor.u32 %v1084, %v1085
        %v1087 = vrot.slane %v1086, 4
        %v1088 = vshrl.u32 %v510, 16
        %v1090 = vrot.slane %v1088, 5
        %v1091 = vrot.slane %v1074, 6
        %v1092 = vor.u32 %v1090, %v1091
        %v1093 = vsel %vm683, %v1087, %v1092
        %v1095 = vshrl.u32 %v511, 16
        %v1097 = vrot.slane %v1095, 4
        %v1098 = vshll.u32 %v511, 16
        %v1100 = vrot.slane %v1098, 5
        %v1101 = vor.u32 %v1097, %v1100
        %v1102 = vrot.slane %v1101, 4
        %v1104 = vshll.u32 %v512, 16
        %v1106 = vrot.slane %v1104, 5
        %v1107 = vsel %vm517, %v1102, %v1106
        %v1110 = vrot.slane %v511, 5
        %v1111 = vrot.slane %v1110, 4
        %v1112 = vrot.slane %v512, 5
        %v1113 = vsel %vm648, %v1111, %v1112
        %v1114 = vrot.slane %v1095, 5
        %v1115 = vrot.slane %v1098, 6
        %v1116 = vor.u32 %v1114, %v1115
        %v1117 = vrot.slane %v1116, 4
        %v1118 = vshrl.u32 %v512, 16
        %v1120 = vrot.slane %v1118, 5
        %v1121 = vrot.slane %v1104, 6
        %v1122 = vor.u32 %v1120, %v1121
        %v1123 = vsel %vm683, %v1117, %v1122
        %v1125 = vshrl.u32 %v513, 16
        %v1127 = vrot.slane %v1125, 4
        %v1128 = vshll.u32 %v513, 16
        %v1130 = vrot.slane %v1128, 5
        %v1131 = vor.u32 %v1127, %v1130
        %v1132 = vrot.slane %v1131, 4
        %v1134 = vshll.u32 %v514, 16
        %v1136 = vrot.slane %v1134, 5
        %v1137 = vsel %vm517, %v1132, %v1136
        %v1140 = vrot.slane %v513, 5
        %v1141 = vrot.slane %v1140, 4
        %v1142 = vrot.slane %v514, 5
        %v1143 = vsel %vm648, %v1141, %v1142
        %v1144 = vrot.slane %v1125, 5
        %v1145 = vrot.slane %v1128, 6
        %v1146 = vor.u32 %v1144, %v1145
        %v1147 = vrot.slane %v1146, 4
        %v1148 = vshrl.u32 %v514, 16
        %v1150 = vrot.slane %v1148, 5
        %v1151 = vrot.slane %v1134, 6
        %v1152 = vor.u32 %v1150, %v1151
        %v1153 = vsel %vm683, %v1147, %v1152
        %v1154 = vunpack.c.l.b16 %v473
        %v1155 = vunpack.c.l.b16 %v477
        %v1156 = vunpack.c.l.b16 %v481
        %v1157 = vunpack.c.l.b16 %v485
        %v1158 = vunpack.c.l.b16 %v489
        %v1159 = vunpack.c.l.b16 %v493
        %v1160 = vunpack.c.l.b16 %v497
        %v1161 = vunpack.c.l.b16 %v501
        %v1162 = vpack.c.b16 %v1155, %v1154
        %v1163 = vpack.c.b16 %v1157, %v1156
        %v1164 = vpack.c.b16 %v1159, %v1158
        %v1165 = vpack.c.b16 %v1161, %v1160
        %v1166 = vunpack.c.l.b16 %v531
        %v1167 = vunpack.c.l.b16 %v545
        %v1168 = vunpack.c.l.b16 %v559
        %v1169 = vunpack.c.l.b16 %v573
        %v1170 = vunpack.c.l.b16 %v587
        %v1171 = vunpack.c.l.b16 %v601
        %v1172 = vunpack.c.l.b16 %v615
        %v1173 = vunpack.c.l.b16 %v629
        %v1174 = vpack.c.b16 %v1167, %v1166
        %v1175 = vpack.c.b16 %v1169, %v1168
        %v1176 = vpack.c.b16 %v1171, %v1170
        %v1177 = vpack.c.b16 %v1173, %v1172
        %1178 = vrot.lane.b32.xlu0 %v1174, 8
        %v1179 = vpop.permute.xlu0 %1178
        %1180 = vrot.lane.b32.xlu0 %v1175, 8
        %v1181 = vpop.permute.xlu0 %1180
        %1182 = vrot.lane.b32.xlu0 %v1176, 8
        %v1183 = vpop.permute.xlu0 %1182
        %1184 = vrot.lane.b32.xlu0 %v1177, 8
        %v1185 = vpop.permute.xlu0 %1184
        %v1186 = vunpack.c.l.b16 %v652
        %v1187 = vunpack.c.l.b16 %v656
        %v1188 = vunpack.c.l.b16 %v660
        %v1189 = vunpack.c.l.b16 %v664
        %v1190 = vunpack.c.l.b16 %v668
        %v1191 = vunpack.c.l.b16 %v672
        %v1192 = vunpack.c.l.b16 %v676
        %v1193 = vunpack.c.l.b16 %v680
        %v1194 = vpack.c.b16 %v1187, %v1186
        %v1195 = vpack.c.b16 %v1189, %v1188
        %v1196 = vpack.c.b16 %v1191, %v1190
        %v1197 = vpack.c.b16 %v1193, %v1192
        %1198 = vrot.lane.b32.xlu0 %v1194, 16
        %v1199 = vpop.permute.xlu0 %1198
        %1200 = vrot.lane.b32.xlu0 %v1195, 16
        %v1201 = vpop.permute.xlu0 %1200
        %1202 = vrot.lane.b32.xlu0 %v1196, 16
        %v1203 = vpop.permute.xlu0 %1202
        %1204 = vrot.lane.b32.xlu0 %v1197, 16
        %v1205 = vpop.permute.xlu0 %1204
        %v1206 = vunpack.c.l.b16 %v693
        %v1207 = vunpack.c.l.b16 %v703
        %v1208 = vunpack.c.l.b16 %v713
        %v1209 = vunpack.c.l.b16 %v723
        %v1210 = vunpack.c.l.b16 %v733
        %v1211 = vunpack.c.l.b16 %v743
        %v1212 = vunpack.c.l.b16 %v753
        %v1213 = vunpack.c.l.b16 %v763
        %v1214 = vpack.c.b16 %v1207, %v1206
        %v1215 = vpack.c.b16 %v1209, %v1208
        %v1216 = vpack.c.b16 %v1211, %v1210
        %v1217 = vpack.c.b16 %v1213, %v1212
        %1218 = vrot.lane.b32.xlu0 %v1214, 24
        %v1219 = vpop.permute.xlu0 %1218
        %1220 = vrot.lane.b32.xlu0 %v1215, 24
        %v1221 = vpop.permute.xlu0 %1220
        %1222 = vrot.lane.b32.xlu0 %v1216, 24
        %v1223 = vpop.permute.xlu0 %1222
        %1224 = vrot.lane.b32.xlu0 %v1217, 24
        %v1225 = vpop.permute.xlu0 %1224
        %v1226 = vunpack.c.l.b16 %v475
        %v1227 = vunpack.c.l.b16 %v479
        %v1228 = vunpack.c.l.b16 %v483
        %v1229 = vunpack.c.l.b16 %v487
        %v1230 = vunpack.c.l.b16 %v491
        %v1231 = vunpack.c.l.b16 %v495
        %v1232 = vunpack.c.l.b16 %v499
        %v1233 = vunpack.c.l.b16 %v503
        %v1234 = vpack.c.b16 %v1227, %v1226
        %v1235 = vpack.c.b16 %v1229, %v1228
        %v1236 = vpack.c.b16 %v1231, %v1230
        %v1237 = vpack.c.b16 %v1233, %v1232
        %1238 = vrot.lane.b32.xlu0 %v1234, 32
        %v1239 = vpop.permute.xlu0 %1238
        %1240 = vrot.lane.b32.xlu0 %v1235, 32
        %v1241 = vpop.permute.xlu0 %1240
        %1242 = vrot.lane.b32.xlu0 %v1236, 32
        %v1243 = vpop.permute.xlu0 %1242
        %1244 = vrot.lane.b32.xlu0 %v1237, 32
        %v1245 = vpop.permute.xlu0 %1244
        %v1246 = vunpack.c.l.b16 %v777
        %v1247 = vunpack.c.l.b16 %v791
        %v1248 = vunpack.c.l.b16 %v805
        %v1249 = vunpack.c.l.b16 %v819
        %v1250 = vunpack.c.l.b16 %v833
        %v1251 = vunpack.c.l.b16 %v847
        %v1252 = vunpack.c.l.b16 %v861
        %v1253 = vunpack.c.l.b16 %v875
        %v1254 = vpack.c.b16 %v1247, %v1246
        %v1255 = vpack.c.b16 %v1249, %v1248
        %v1256 = vpack.c.b16 %v1251, %v1250
        %v1257 = vpack.c.b16 %v1253, %v1252
        %1258 = vrot.lane.b32.xlu0 %v1254, 40
        %v1259 = vpop.permute.xlu0 %1258
        %1260 = vrot.lane.b32.xlu0 %v1255, 40
        %v1261 = vpop.permute.xlu0 %1260
        %1262 = vrot.lane.b32.xlu0 %v1256, 40
        %v1263 = vpop.permute.xlu0 %1262
        %1264 = vrot.lane.b32.xlu0 %v1257, 40
        %v1265 = vpop.permute.xlu0 %1264
        %v1266 = vunpack.c.l.b16 %v895
        %v1267 = vunpack.c.l.b16 %v899
        %v1268 = vunpack.c.l.b16 %v903
        %v1269 = vunpack.c.l.b16 %v907
        %v1270 = vunpack.c.l.b16 %v911
        %v1271 = vunpack.c.l.b16 %v915
        %v1272 = vunpack.c.l.b16 %v919
        %v1273 = vunpack.c.l.b16 %v923
        %v1274 = vpack.c.b16 %v1267, %v1266
        %v1275 = vpack.c.b16 %v1269, %v1268
        %v1276 = vpack.c.b16 %v1271, %v1270
        %v1277 = vpack.c.b16 %v1273, %v1272
        %1278 = vrot.lane.b32.xlu0 %v1274, 48
        %v1279 = vpop.permute.xlu0 %1278
        %1280 = vrot.lane.b32.xlu0 %v1275, 48
        %v1281 = vpop.permute.xlu0 %1280
        %1282 = vrot.lane.b32.xlu0 %v1276, 48
        %v1283 = vpop.permute.xlu0 %1282
        %1284 = vrot.lane.b32.xlu0 %v1277, 48
        %v1285 = vpop.permute.xlu0 %1284
        %v1286 = vunpack.c.l.b16 %v933
        %v1287 = vunpack.c.l.b16 %v943
        %v1288 = vunpack.c.l.b16 %v953
        %v1289 = vunpack.c.l.b16 %v963
        %v1290 = vunpack.c.l.b16 %v973
        %v1291 = vunpack.c.l.b16 %v983
        %v1292 = vunpack.c.l.b16 %v993
        %v1293 = vunpack.c.l.b16 %v1003
        %v1294 = vpack.c.b16 %v1287, %v1286
        %v1295 = vpack.c.b16 %v1289, %v1288
        %v1296 = vpack.c.b16 %v1291, %v1290
        %v1297 = vpack.c.b16 %v1293, %v1292
        %1298 = vrot.lane.b32.xlu0 %v1294, 56
        %v1299 = vpop.permute.xlu0 %1298
        %1300 = vrot.lane.b32.xlu0 %v1295, 56
        %v1301 = vpop.permute.xlu0 %1300
        %1302 = vrot.lane.b32.xlu0 %v1296, 56
        %v1303 = vpop.permute.xlu0 %1302
        %1304 = vrot.lane.b32.xlu0 %v1297, 56
        %v1305 = vpop.permute.xlu0 %1304
        %v1306 = vunpack.c.l.b16 %v505
        %v1307 = vpack.c.b16 %v1156, %v1155
        %v1308 = vpack.c.b16 %v1158, %v1157
        %v1309 = vpack.c.b16 %v1160, %v1159
        %v1310 = vpack.c.b16 %v1306, %v1161
        %1311 = vrot.lane.b32.xlu0 %v1307, 64
        %v1312 = vpop.permute.xlu0 %1311
        %1313 = vrot.lane.b32.xlu0 %v1308, 64
        %v1314 = vpop.permute.xlu0 %1313
        %1315 = vrot.lane.b32.xlu0 %v1309, 64
        %v1316 = vpop.permute.xlu0 %1315
        %1317 = vrot.lane.b32.xlu0 %v1310, 64
        %v1318 = vpop.permute.xlu0 %1317
        %v1319 = vunpack.c.l.b16 %v1017
        %v1320 = vpack.c.b16 %v1168, %v1167
        %v1321 = vpack.c.b16 %v1170, %v1169
        %v1322 = vpack.c.b16 %v1172, %v1171
        %v1323 = vpack.c.b16 %v1319, %v1173
        %1324 = vrot.lane.b32.xlu0 %v1320, 72
        %v1325 = vpop.permute.xlu0 %1324
        %1326 = vrot.lane.b32.xlu0 %v1321, 72
        %v1327 = vpop.permute.xlu0 %1326
        %1328 = vrot.lane.b32.xlu0 %v1322, 72
        %v1329 = vpop.permute.xlu0 %1328
        %1330 = vrot.lane.b32.xlu0 %v1323, 72
        %v1331 = vpop.permute.xlu0 %1330
        %v1332 = vunpack.c.l.b16 %v1023
        %v1333 = vpack.c.b16 %v1188, %v1187
        %v1334 = vpack.c.b16 %v1190, %v1189
        %v1335 = vpack.c.b16 %v1192, %v1191
        %v1336 = vpack.c.b16 %v1332, %v1193
        %1337 = vrot.lane.b32.xlu0 %v1333, 80
        %v1338 = vpop.permute.xlu0 %1337
        %1339 = vrot.lane.b32.xlu0 %v1334, 80
        %v1340 = vpop.permute.xlu0 %1339
        %1341 = vrot.lane.b32.xlu0 %v1335, 80
        %v1342 = vpop.permute.xlu0 %1341
        %1343 = vrot.lane.b32.xlu0 %v1336, 80
        %v1344 = vpop.permute.xlu0 %1343
        %v1345 = vunpack.c.l.b16 %v1033
        %v1346 = vpack.c.b16 %v1208, %v1207
        %v1347 = vpack.c.b16 %v1210, %v1209
        %v1348 = vpack.c.b16 %v1212, %v1211
        %v1349 = vpack.c.b16 %v1345, %v1213
        %1350 = vrot.lane.b32.xlu0 %v1346, 88
        %v1351 = vpop.permute.xlu0 %1350
        %1352 = vrot.lane.b32.xlu0 %v1347, 88
        %v1353 = vpop.permute.xlu0 %1352
        %1354 = vrot.lane.b32.xlu0 %v1348, 88
        %v1355 = vpop.permute.xlu0 %1354
        %1356 = vrot.lane.b32.xlu0 %v1349, 88
        %v1357 = vpop.permute.xlu0 %1356
        %v1358 = vunpack.c.l.b16 %v507
        %v1359 = vpack.c.b16 %v1228, %v1227
        %v1360 = vpack.c.b16 %v1230, %v1229
        %v1361 = vpack.c.b16 %v1232, %v1231
        %v1362 = vpack.c.b16 %v1358, %v1233
        %1363 = vrot.lane.b32.xlu0 %v1359, 96
        %v1364 = vpop.permute.xlu0 %1363
        %1365 = vrot.lane.b32.xlu0 %v1360, 96
        %v1366 = vpop.permute.xlu0 %1365
        %1367 = vrot.lane.b32.xlu0 %v1361, 96
        %v1368 = vpop.permute.xlu0 %1367
        %1369 = vrot.lane.b32.xlu0 %v1362, 96
        %v1370 = vpop.permute.xlu0 %1369
        %v1371 = vunpack.c.l.b16 %v1047
        %v1372 = vpack.c.b16 %v1248, %v1247
        %v1373 = vpack.c.b16 %v1250, %v1249
        %v1374 = vpack.c.b16 %v1252, %v1251
        %v1375 = vpack.c.b16 %v1371, %v1253
        %1376 = vrot.lane.b32.xlu0 %v1372, 104
        %v1377 = vpop.permute.xlu0 %1376
        %1378 = vrot.lane.b32.xlu0 %v1373, 104
        %v1379 = vpop.permute.xlu0 %1378
        %1380 = vrot.lane.b32.xlu0 %v1374, 104
        %v1381 = vpop.permute.xlu0 %1380
        %1382 = vrot.lane.b32.xlu0 %v1375, 104
        %v1383 = vpop.permute.xlu0 %1382
        %v1384 = vunpack.c.l.b16 %v1053
        %v1385 = vpack.c.b16 %v1268, %v1267
        %v1386 = vpack.c.b16 %v1270, %v1269
        %v1387 = vpack.c.b16 %v1272, %v1271
        %v1388 = vpack.c.b16 %v1384, %v1273
        %1389 = vrot.lane.b32.xlu0 %v1385, 112
        %v1390 = vpop.permute.xlu0 %1389
        %1391 = vrot.lane.b32.xlu0 %v1386, 112
        %v1392 = vpop.permute.xlu0 %1391
        %1393 = vrot.lane.b32.xlu0 %v1387, 112
        %v1394 = vpop.permute.xlu0 %1393
        %1395 = vrot.lane.b32.xlu0 %v1388, 112
        %v1396 = vpop.permute.xlu0 %1395
        %v1397 = vunpack.c.l.b16 %v1063
        %v1398 = vpack.c.b16 %v1288, %v1287
        %v1399 = vpack.c.b16 %v1290, %v1289
        %v1400 = vpack.c.b16 %v1292, %v1291
        %v1401 = vpack.c.b16 %v1397, %v1293
        %1402 = vrot.lane.b32.xlu0 %v1398, 120
        %v1403 = vpop.permute.xlu0 %1402
        %1404 = vrot.lane.b32.xlu0 %v1399, 120
        %v1405 = vpop.permute.xlu0 %1404
        %1406 = vrot.lane.b32.xlu0 %v1400, 120
        %v1407 = vpop.permute.xlu0 %1406
        %1408 = vrot.lane.b32.xlu0 %v1401, 120
        %v1409 = vpop.permute.xlu0 %1408
        %vm1410 = vcmask 64512
        %v1413 = vsel %vm1410, %v1162, %v1179
        %v1416 = vsel %vm1410, %v1163, %v1181
        %v1419 = vsel %vm1410, %v1164, %v1183
        %v1422 = vsel %vm1410, %v1165, %v1185
        %vm1423 = vcmask 130048
        %v1425 = vsel %vm1423, %v1413, %v1199
        %v1427 = vsel %vm1423, %v1416, %v1201
        %v1429 = vsel %vm1423, %v1419, %v1203
        %v1431 = vsel %vm1423, %v1422, %v1205
        %vm1432 = vcmask 195584
        %v1434 = vsel %vm1432, %v1425, %v1219
        %v1436 = vsel %vm1432, %v1427, %v1221
        %v1438 = vsel %vm1432, %v1429, %v1223
        %v1440 = vsel %vm1432, %v1431, %v1225
        %vm1441 = vcmask 261120
        %v1443 = vsel %vm1441, %v1434, %v1239
        %v1445 = vsel %vm1441, %v1436, %v1241
        %v1447 = vsel %vm1441, %v1438, %v1243
        %v1449 = vsel %vm1441, %v1440, %v1245
        %vm1450 = vcmask 326656
        %v1452 = vsel %vm1450, %v1443, %v1259
        %v1454 = vsel %vm1450, %v1445, %v1261
        %v1456 = vsel %vm1450, %v1447, %v1263
        %v1458 = vsel %vm1450, %v1449, %v1265
        %vm1459 = vcmask 392192
        %v1461 = vsel %vm1459, %v1452, %v1279
        %v1463 = vsel %vm1459, %v1454, %v1281
        %v1465 = vsel %vm1459, %v1456, %v1283
        %v1467 = vsel %vm1459, %v1458, %v1285
        %vm1468 = vcmask 457728
        %v1470 = vsel %vm1468, %v1461, %v1299
        %v1472 = vsel %vm1468, %v1463, %v1301
        %v1474 = vsel %vm1468, %v1465, %v1303
        %v1476 = vsel %vm1468, %v1467, %v1305
        %vm1477 = vcmask 523264
        %v1479 = vsel %vm1477, %v1470, %v1312
        %v1481 = vsel %vm1477, %v1472, %v1314
        %v1483 = vsel %vm1477, %v1474, %v1316
        %v1485 = vsel %vm1477, %v1476, %v1318
        %vm1486 = vcmask 588800
        %v1488 = vsel %vm1486, %v1479, %v1325
        %v1490 = vsel %vm1486, %v1481, %v1327
        %v1492 = vsel %vm1486, %v1483, %v1329
        %v1494 = vsel %vm1486, %v1485, %v1331
        %vm1495 = vcmask 654336
        %v1497 = vsel %vm1495, %v1488, %v1338
        %v1499 = vsel %vm1495, %v1490, %v1340
        %v1501 = vsel %vm1495, %v1492, %v1342
        %v1503 = vsel %vm1495, %v1494, %v1344
        %vm1504 = vcmask 719872
        %v1506 = vsel %vm1504, %v1497, %v1351
        %v1508 = vsel %vm1504, %v1499, %v1353
        %v1510 = vsel %vm1504, %v1501, %v1355
        %v1512 = vsel %vm1504, %v1503, %v1357
        %vm1513 = vcmask 785408
        %v1515 = vsel %vm1513, %v1506, %v1364
        %v1517 = vsel %vm1513, %v1508, %v1366
        %v1519 = vsel %vm1513, %v1510, %v1368
        %v1521 = vsel %vm1513, %v1512, %v1370
        %vm1522 = vcmask 850944
        %v1524 = vsel %vm1522, %v1515, %v1377
        %v1526 = vsel %vm1522, %v1517, %v1379
        %v1528 = vsel %vm1522, %v1519, %v1381
        %v1530 = vsel %vm1522, %v1521, %v1383
        %vm1531 = vcmask 916480
        %v1533 = vsel %vm1531, %v1524, %v1390
        %v1535 = vsel %vm1531, %v1526, %v1392
        %v1537 = vsel %vm1531, %v1528, %v1394
        %v1539 = vsel %vm1531, %v1530, %v1396
        %vm1540 = vcmask 982016
        %v1542 = vsel %vm1540, %v1533, %v1403
        %v1545 = vsel %vm1540, %v1535, %v1405
        %v1548 = vsel %vm1540, %v1537, %v1407
        %v1551 = vsel %vm1540, %v1539, %v1409
        %v1553 = vunpack.c.l.b16 %v509
        %v1554 = vpack.c.b16 %v1553, %v1306
        %v1555 = vunpack.c.l.b16 %v1077
        %v1556 = vpack.c.b16 %v1555, %v1319
        %1557 = vrot.lane.b32.xlu0 %v1556, 8
        %v1558 = vpop.permute.xlu0 %1557
        %v1559 = vunpack.c.l.b16 %v1083
        %v1560 = vpack.c.b16 %v1559, %v1332
        %1561 = vrot.lane.b32.xlu0 %v1560, 16
        %v1562 = vpop.permute.xlu0 %1561
        %v1563 = vunpack.c.l.b16 %v1093
        %v1564 = vpack.c.b16 %v1563, %v1345
        %1565 = vrot.lane.b32.xlu0 %v1564, 24
        %v1566 = vpop.permute.xlu0 %1565
        %v1567 = vunpack.c.l.b16 %v511
        %v1568 = vpack.c.b16 %v1567, %v1358
        %1569 = vrot.lane.b32.xlu0 %v1568, 32
        %v1570 = vpop.permute.xlu0 %1569
        %v1571 = vunpack.c.l.b16 %v1107
        %v1572 = vpack.c.b16 %v1571, %v1371
        %1573 = vrot.lane.b32.xlu0 %v1572, 40
        %v1574 = vpop.permute.xlu0 %1573
        %v1575 = vunpack.c.l.b16 %v1113
        %v1576 = vpack.c.b16 %v1575, %v1384
        %1577 = vrot.lane.b32.xlu0 %v1576, 48
        %v1578 = vpop.permute.xlu0 %1577
        %v1579 = vunpack.c.l.b16 %v1123
        %v1580 = vpack.c.b16 %v1579, %v1397
        %1581 = vrot.lane.b32.xlu0 %v1580, 56
        %v1582 = vpop.permute.xlu0 %1581
        %v1583 = vunpack.c.l.b16 %v513
        %v1584 = vpack.c.b16 %v1583, %v1553
        %1585 = vrot.lane.b32.xlu0 %v1584, 64
        %v1586 = vpop.permute.xlu0 %1585
        %v1587 = vunpack.c.l.b16 %v1137
        %v1588 = vpack.c.b16 %v1587, %v1555
        %1589 = vrot.lane.b32.xlu0 %v1588, 72
        %v1590 = vpop.permute.xlu0 %1589
        %v1591 = vunpack.c.l.b16 %v1143
        %v1592 = vpack.c.b16 %v1591, %v1559
        %1593 = vrot.lane.b32.xlu0 %v1592, 80
        %v1594 = vpop.permute.xlu0 %1593
        %v1595 = vunpack.c.l.b16 %v1153
        %v1596 = vpack.c.b16 %v1595, %v1563
        %1597 = vrot.lane.b32.xlu0 %v1596, 88
        %v1598 = vpop.permute.xlu0 %1597
        %v1601 = vsel %vm1410, %v1554, %v1558
        %v1603 = vsel %vm1423, %v1601, %v1562
        %v1605 = vsel %vm1432, %v1603, %v1566
        %v1607 = vsel %vm1441, %v1605, %v1570
        %v1609 = vsel %vm1450, %v1607, %v1574
        %v1611 = vsel %vm1459, %v1609, %v1578
        %v1613 = vsel %vm1468, %v1611, %v1582
        %v1615 = vsel %vm1477, %v1613, %v1586
        %v1617 = vsel %vm1486, %v1615, %v1590
        %v1619 = vsel %vm1495, %v1617, %v1594
        %v1621 = vsel %vm1504, %v1619, %v1598
        %v1622 = vld [vmem:[%s4] sm:$0xf]
        %v1623 = vld [vmem:[%s4 + $0x4] sm:$0xf]
        %v1624 = vld [vmem:[%s4 + $0x8] sm:$0xf]
        %v1625 = vld [vmem:[%s4 + $0xc] sm:$0xf]
        %v1626 = vld [vmem:[%s4 + $0x10] sm:$0xf]
        %v1627 = vld [vmem:[%s4 + $0x14] sm:$0xf]
        %v1628 = vld [vmem:[%s4 + $0x18] sm:$0xf]
        %v1629 = vld [vmem:[%s4 + $0x1c] sm:$0xf]
        %v1630 = vld [vmem:[%s4 + $0x20] sm:$0xf]
        %v1631 = vld [vmem:[%s4 + $0x24] sm:$0xf]
        %v1632 = vld [vmem:[%s4 + $0x28] sm:$0xf]
        %v1633 = vld [vmem:[%s4 + $0x2c] sm:$0xf]
        %v1634 = vld [vmem:[%s4 + $0x30] sm:$0xf]
        %v1635 = vld [vmem:[%s4 + $0x34] sm:$0xf]
        %v1636 = vld [vmem:[%s4 + $0x38] sm:$0xf]
        %v1637 = vld [vmem:[%s4 + $0x3c] sm:$0xf]
        %v1638 = vld [vmem:[%s4 + $0x40] sm:$0xf]
        %v1639 = vld [vmem:[%s4 + $0x44] sm:$0xf]
        %v1640 = vld [vmem:[%s4 + $0x48] sm:$0xf]
        %v1641 = vld [vmem:[%s4 + $0x4c] sm:$0xf]
        %v1642 = vld [vmem:[%s4 + $0x50] sm:$0xf]
        %v1643 = vld [vmem:[%s4 + $0x54] sm:$0xf]
        %v1644 = vld [vmem:[%s4 + $0x58] sm:$0xf]
        %v1645 = vld [vmem:[%s4 + $0x5c] sm:$0xf]
        %v1646 = vld [vmem:[%s4 + $0x60] sm:$0xf]
        %v1647 = vld [vmem:[%s4 + $0x64] sm:$0xf]
        %v1648 = vld [vmem:[%s4 + $0x68] sm:$0xf]
        %v1649 = vld [vmem:[%s4 + $0x6c] sm:$0xf]
        %v1650 = vld [vmem:[%s5] sm:$0x1]
        %v1652 = vlaneseq
        %v1653 = vshrl.u32 %v1652, 7
        %v1654 = vsub.s32 0, %v1653
        %v1655 = vrot.slane %v1650, %v1654
        %v1685 = vunpack.c.l.b16 %v1622
        %v1686 = vunpack.c.l.b16 %v1623
        %v1687 = vunpack.c.l.b16 %v1624
        %v1688 = vunpack.c.l.b16 %v1625
        %v1689 = vunpack.c.l.b16 %v1626
        %v1690 = vunpack.c.l.b16 %v1627
        %v1691 = vunpack.c.l.b16 %v1628
        %v1692 = vunpack.c.l.b16 %v1629
        %v1693 = vunpack.c.l.b16 %v1630
        %v1694 = vunpack.c.l.b16 %v1631
        %v1695 = vunpack.c.l.b16 %v1632
        %v1696 = vunpack.c.l.b16 %v1633
        %v1697 = vunpack.c.l.b16 %v1634
        %v1698 = vunpack.c.l.b16 %v1635
        %v1699 = vunpack.c.l.b16 %v1636
        %v1700 = vunpack.c.l.b16 %v1637
        %v1701 = vunpack.c.l.b16 %v1638
        %v1702 = vunpack.c.l.b16 %v1639
        %v1703 = vunpack.c.l.b16 %v1640
        %v1704 = vunpack.c.l.b16 %v1641
        %v1705 = vunpack.c.l.b16 %v1642
        %v1706 = vunpack.c.l.b16 %v1643
        %v1707 = vunpack.c.l.b16 %v1644
        %v1708 = vunpack.c.l.b16 %v1645
        %v1709 = vunpack.c.l.b16 %v1646
        %v1710 = vunpack.c.l.b16 %v1647
        %v1711 = vunpack.c.l.b16 %v1648
        %v1712 = vunpack.c.l.b16 %v1649
        %v1713 = vpack.c.b16 %v1686, %v1685
        %v1714 = vpack.c.b16 %v1688, %v1687
        %v1715 = vpack.c.b16 %v1690, %v1689
        %v1716 = vpack.c.b16 %v1692, %v1691
        %v1717 = vpack.c.b16 %v1694, %v1693
        %v1718 = vpack.c.b16 %v1696, %v1695
        %v1719 = vpack.c.b16 %v1698, %v1697
        %v1720 = vpack.c.b16 %v1700, %v1699
        %v1721 = vpack.c.b16 %v1702, %v1701
        %v1722 = vpack.c.b16 %v1704, %v1703
        %v1723 = vpack.c.b16 %v1706, %v1705
        %v1724 = vpack.c.b16 %v1708, %v1707
        %v1725 = vpack.c.b16 %v1710, %v1709
        %v1726 = vpack.c.b16 %v1712, %v1711
        %v1741 = vsel %vm1513, %v1508, 0
        %v1743 = vsel %vm1513, %v1510, 0
        %v1745 = vsel %vm1513, %v1512, 0
        %v1747 = vsel %vm1513, %v1621, 0
        %1749 = vmatprep.subr.bf16.mxu0 0
        %1750 = vmatpush1.bf16.msra.mxu0 %v1720
        %1751 = vmatprep.subr.bf16.mxu0 0
        %1752 = vmatpush1.bf16.msra.mxu0 %v1719
        %1753 = vmatprep.subr.bf16.mxu0 0
        %1754 = vmatpush1.bf16.msra.mxu0 %v1718
        %1755 = vmatprep.subr.bf16.mxu0 0
        %1756 = vmatpush1.bf16.msra.mxu0 %v1717
        %1757 = vmatprep.subr.bf16.mxu0 0
        %1758 = vmatpush1.bf16.msra.mxu0 %v1716
        %1759 = vmatprep.subr.bf16.mxu0 0
        %1760 = vmatpush1.bf16.msra.mxu0 %v1715
        %1761 = vmatprep.subr.bf16.mxu0 0
        %1762 = vmatpush1.bf16.msra.mxu0 %v1714
        %1763 = vmatprep.subr.bf16.mxu0 0
        %1764 = vmatpush1.bf16.msra.mxu0 %v1713
        %1765 = vmatprep.subr.bf16.mxu0 0
        %1766 = vmatpush2.bf16.msra.mxu0 0
        %1767 = vmatprep.subr.bf16.mxu0 0
        %1768 = vmatpush2.bf16.msra.mxu0 0
        %1769 = vmatprep.subr.bf16.mxu0 0
        %1770 = vmatpush2.bf16.msra.mxu0 %v1726
        %1771 = vmatprep.subr.bf16.mxu0 0
        %1772 = vmatpush2.bf16.msra.mxu0 %v1725
        %1773 = vmatprep.subr.bf16.mxu0 0
        %1774 = vmatpush2.bf16.msra.mxu0 %v1724
        %1775 = vmatprep.subr.bf16.mxu0 0
        %1776 = vmatpush2.bf16.msra.mxu0 %v1723
        %1777 = vmatprep.subr.bf16.mxu0 0
        %1778 = vmatpush2.bf16.msra.mxu0 %v1722
        %1779 = vmatprep.subr.bf16.mxu0 0
        %1780 = vmatpush2.bf16.msra.mxu0 %v1721
        %1781 = vmatprep.mubr.bf16.mxu0 %v1741
        %1782 = vmatmul.mubr.bf16.gmra.mxu0 %v1542
        %v1783 = vpop.f32.mrf.mxu0
        %v1784 = vadd.f32 %v1655, %v1783
        %v1785 = vpop.f32.mrf.mxu0
        %v1786 = vpop.f32.mrf.mxu0
        %v1787 = vadd.f32 %v1655, %v1786
        %v1788 = vpop.f32.mrf.mxu0
        %1789 = vmatprep.mubr.bf16.mxu0 %v1743
        %1790 = vmatmul.mubr.bf16.gmra.mxu0 %v1545
        %v1791 = vpop.f32.mrf.mxu0
        %v1792 = vadd.f32 %v1655, %v1791
        %v1793 = vpop.f32.mrf.mxu0
        %v1794 = vpop.f32.mrf.mxu0
        %v1795 = vadd.f32 %v1655, %v1794
        %v1796 = vpop.f32.mrf.mxu0
        %1797 = vmatprep.mubr.bf16.mxu0 %v1745
        %1798 = vmatmul.mubr.bf16.gmra.mxu0 %v1548
        %v1799 = vpop.f32.mrf.mxu0
        %v1800 = vadd.f32 %v1655, %v1799
        %v1801 = vpop.f32.mrf.mxu0
        %v1802 = vpop.f32.mrf.mxu0
        %v1803 = vadd.f32 %v1655, %v1802
        %v1804 = vpop.f32.mrf.mxu0
        %1805 = vmatprep.mubr.bf16.mxu0 %v1747
        %1806 = vmatmul.mubr.bf16.gmra.mxu0 %v1551
        %v1807 = vpop.f32.mrf.mxu0
        %v1808 = vadd.f32 %v1655, %v1807
        %v1809 = vpop.f32.mrf.mxu0
        %v1810 = vpop.f32.mrf.mxu0
        %v1811 = vadd.f32 %v1655, %v1810
        %v1812 = vpop.f32.mrf.mxu0
        %1813 = vdwg.mxu0
        %v1814 = vmax.f32 %v1784, 0.0
        %v1815 = vmax.f32 %v1787, 0.0
        %v1816 = vmax.f32 %v1792, 0.0
        %v1817 = vmax.f32 %v1795, 0.0
        %v1818 = vmax.f32 %v1800, 0.0
        %v1819 = vmax.f32 %v1803, 0.0
        %v1820 = vmax.f32 %v1808, 0.0
        %v1821 = vmax.f32 %v1811, 0.0
        %v1822 = vpack.c.bf16 %v1814, %v1814
        %v1823 = vpack.c.bf16 %v1815, %v1815
        %v1824 = vpack.c.bf16 %v1816, %v1816
        %v1825 = vpack.c.bf16 %v1817, %v1817
        %v1826 = vpack.c.bf16 %v1818, %v1818
        %v1827 = vpack.c.bf16 %v1819, %v1819
        %v1828 = vpack.c.bf16 %v1820, %v1820
        %v1829 = vpack.c.bf16 %v1821, %v1821
        %vm1830 = vcmask 519168
        %1831 = vst.msk [vmem:[%s404] sm:$0xf] %vm1830, %v1822
        %1832 = vst.msk [vmem:[%s404 + $0x4] sm:$0xf] %vm1830, %v1823
        %1833 = vst.msk [vmem:[%s404 + $0x8] sm:$0xf] %vm1830, %v1824
        %1834 = vst.msk [vmem:[%s404 + $0xc] sm:$0xf] %vm1830, %v1825
        %1835 = vst.msk [vmem:[%s404 + $0x10] sm:$0xf] %vm1830, %v1826
        %1836 = vst.msk [vmem:[%s404 + $0x14] sm:$0xf] %vm1830, %v1827
        %1837 = vst.msk [vmem:[%s404 + $0x18] sm:$0xf] %vm1830, %v1828
        %1838 = vst.msk [vmem:[%s404 + $0x1c] sm:$0xf] %vm1830, %v1829
        %s1839 = sand.u32 %s212, 1
        %s1840 = scalar_lea.sflag [#allocation3], %s1839
        %s1841 = sand.u32 %s212, 1
        %s1842 = smul.addr %s1841, 32
        %s1843 = scalar_lea.vmem [#allocation2], %s1842
        // Predicated region
        $region45: #{conv_bn_relu.1} parent=43 // pred_check
          %p1844 = pneg %p222
        $region46: #{conv_bn_relu.1} parent=43 // pred_check_branch
          %1846 = sbr.rel (%p1844) target = $region48
        $region47: #{conv_bn_relu.1} parent=43 // pred_region
          %s1847 = smul.u32 8, %s25
          %s1849 = ssub.s32 512, 512
          %1850 = vsyncadd %s1840, %s1849
          %s1851 = smul.addr %s24, 8
          %s1852 = sadd.s32 %s1847, %s1851
          %s1853 = smul.addr %s1852, 64
          %s1854 = scalar_lea.hbm %s6, %s1853
          %s1855 = sshll.u32 %s1843, 4
          %s1856 = int_to_ptr.vmem [resolvable:$true] %s1855
          %1861 = dma.vmem_to_hbm [thread:$0]  %s1856, 512, %s1854, %s1840, 64, 64, 4
        $region48: #{conv_bn_relu.1} parent=43 // pred_fallthru
          _
      $region44: #{conv_bn_relu.1} parent=5 // pred_fallthru
        _
      %p1862 = scmp.le.s32.totalorder 2, %s15
      // Predicated region
      $region49: #{conv_bn_relu.1} parent=5 // pred_check
        %p1863 = pneg %p1862
      $region50: #{conv_bn_relu.1} parent=5 // pred_check_branch
        %1865 = sbr.rel (%p1863) target = $region52
      $region51: #{conv_bn_relu.1} parent=5 // pred_region
        %s1866 = ssub.s32 %s15, 2
        // Predicated region
        $region53: #{conv_bn_relu.1} parent=51 // pred_check
          %p1867 = pneg %p228
        $region54: #{conv_bn_relu.1} parent=51 // pred_check_branch
          %1869 = sbr.rel (%p1867) target = $region56
        $region55: #{conv_bn_relu.1} parent=51 // pred_region
          %s1870 = sand.u32 %s213, 1
          %s1871 = scalar_lea.sflag [#allocation3], %s1870
          %s1872 = sand.u32 %s213, 1
          %s1873 = smul.addr %s1872, 32
          %s1874 = scalar_lea.vmem [#allocation2], %s1873
          %1875 = dma.done %s1871, 512
        $region56: #{conv_bn_relu.1} parent=51 // pred_fallthru
          _
      $region52: #{conv_bn_relu.1} parent=5 // pred_fallthru
        _
    $region6: #{conv_bn_relu.1} parent=1 // loop_footer
      %s19 = sadd.s32 1, %s15
    $region7: #{conv_bn_relu.1} parent=1 // loop_footer_branch
      %14 = sbr.rel target = $region3
    $region8: #{conv_bn_relu.1} parent=1 // loop_exit
      _
    %1876 = vsyncpa [#allocation3], 1
    %s1877 = scalar_lea.sflag [#allocation3], 1
    %1878 = vsyncpa %s1877, 1

</llo_original>
